<compile_context>
chip_gen: v6e
topology: v6e:2x2x1
jax: 0.10.0
libtpu: 0.0.40
codegen_flags: <defaults>
</compile_context>

<pallas_src>
import math

import jax
import jax.numpy as jnp
from jax import lax
from jax.experimental import pallas as pl
from jax.experimental.pallas import tpu as pltpu

# ---------------- model hyper-params (small, consistent with the module) ----
B = 2            # batch (number of texts)
S = 8            # sequence length (tokens)
C = 8            # num_coins
H = 64           # bert hidden size (stand-in for 768)
NUM_HEADS = 4
HEAD_DIM = H // NUM_HEADS
HIDDEN = 32      # hidden_dim of the presence/impact heads

# ---------------- packed weight-slab layout (single VMEM input) -------------
SLAB_COLS = 4 * H      # 256 lanes: [wk | wv | wo | w1_attn] in rows 0:H
SLAB_ROWS = 120        # 15 sublane tiles
R_Q = 64               # rows 64:96  : pre-scaled per-head queries (NH*C, HD)
R_CH1 = 96             # rows 96:104 : coin @ w1_coin + b1          (C, 2*HIDDEN)
R_W2T = 104            # rows 104:106: transposed block-diag W2     (2, 2*HIDDEN)
                       #               + [b2p, b2i] at column 2*HIDDEN
R_BIAS = 112           # row 112     : [bk | bv | bo | 0]           (1, 3*H used)


def crypto_impact_kernel(text_ref, slab_ref, pres_ref, imp_ref):
    text = text_ref[...]                                          # (B*S, H)

    # Fused K||V projection: one lane-dense (16,64)@(64,128) MXU pass.
    kv = jnp.dot(text, slab_ref[0:H, 0:2 * H],
                 preferred_element_type=jnp.float32)
    kv = kv + slab_ref[R_BIAS:R_BIAS + 1, 0:2 * H]                # + [bk | bv]

    wo = slab_ref[0:H, 2 * H:3 * H]                               # (H, H)
    w1a = slab_ref[0:H, 3 * H:4 * H]                              # (H, 2*HIDDEN)
    bo = slab_ref[R_BIAS:R_BIAS + 1, 2 * H:3 * H]                 # (1, H)
    coin_h1 = slab_ref[R_CH1:R_CH1 + C, 0:2 * HIDDEN]             # (C, 2*HIDDEN)
    w2t = slab_ref[R_W2T:R_W2T + 2, 0:2 * HIDDEN]                 # (2, 2*HIDDEN)
    b2 = slab_ref[R_W2T:R_W2T + 2, 2 * HIDDEN:2 * HIDDEN + 1]     # (2, 1)

    # Pre-scaled per-head query blocks (constant-folded at init).
    q_heads = [slab_ref[R_Q + h * C:R_Q + (h + 1) * C, 0:HEAD_DIM]
               for h in range(NUM_HEADS)]                         # NH x (C, HD)

    for b in range(B):                     # static loop over the tiny batch
        r0 = b * S
        kb = kv[r0:r0 + S, 0:H]                                   # (S, H)
        vb = kv[r0:r0 + S, H:2 * H]                               # (S, H)

        o_parts = []
        for h in range(NUM_HEADS):         # static loop over heads
            c0 = h * HEAD_DIM
            kh = kb[:, c0:c0 + HEAD_DIM]                          # (S, HD)
            vh = vb[:, c0:c0 + HEAD_DIM]                          # (S, HD)
            # scores (C, S): q @ k^T, 1/sqrt(HD) already folded into q.
            s = lax.dot_general(q_heads[h], kh,
                                (((1,), (1,)), ((), ())),
                                preferred_element_type=jnp.float32)
            s = s - jnp.max(s, axis=-1, keepdims=True)
            p = jnp.exp(s)
            p = p / jnp.sum(p, axis=-1, keepdims=True)            # exact division
            o_parts.append(jnp.dot(p, vh,
                                   preferred_element_type=jnp.float32))
        o_cat = jnp.concatenate(o_parts, axis=1)                  # (C, H)

        # Output projection + fused presence||impact MLP (full-width matmuls).
        attn = jnp.dot(o_cat, wo, preferred_element_type=jnp.float32) + bo
        h1 = jnp.maximum(
            coin_h1 + jnp.dot(attn, w1a, preferred_element_type=jnp.float32),
            0.0)                                                  # (C, 2*HIDDEN)
        # Transposed block-diag second layer -> (2, C): row 0 presence, row 1 impact.
        z = lax.dot_general(w2t, h1, (((1,), (1,)), ((), ())),
                            preferred_element_type=jnp.float32) + b2
        pres_ref[b:b + 1, :] = jax.nn.sigmoid(z[0:1, :])
        imp_ref[b:b + 1, :] = 100.0 * jnp.tanh(z[1:2, :])


def prepare_inputs(coin_emb, params):
    """One-time fusion/packing of all weights (and the constant coin side) into a
    single lane-dense f32 slab.  Runs once at init, NOT in the per-call path."""
    (wq, bq, wk, bk, wv, bv, wo, bo,
     w1p, b1p, w2p, b2p, w1i, b1i, w2i, b2i) = params
    scale = 1.0 / math.sqrt(HEAD_DIM)

    # Coin-side projections are input-independent -> constant-fold at init.
    q_pre = (coin_emb @ wq + bq) * scale                      # (C, H), scale folded
    q_heads = q_pre.reshape(C, NUM_HEADS, HEAD_DIM).transpose(1, 0, 2)
    q_heads = q_heads.reshape(NUM_HEADS * C, HEAD_DIM)        # (NH*C, HD)

    w1c = jnp.concatenate([w1p[:H], w1i[:H]], axis=1)         # (H, 2*HIDDEN)
    w1a = jnp.concatenate([w1p[H:], w1i[H:]], axis=1)         # (H, 2*HIDDEN)
    b1 = jnp.concatenate([b1p, b1i], axis=1)                  # (1, 2*HIDDEN)
    coin_h1 = coin_emb @ w1c + b1                             # (C, 2*HIDDEN)

    zpad = jnp.zeros((1, HIDDEN), jnp.float32)
    w2t = jnp.concatenate(
        [jnp.concatenate([w2p.T, zpad], axis=1),              # presence row
         jnp.concatenate([zpad, w2i.T], axis=1)], axis=0)     # impact row  (2, 2*HIDDEN)

    slab = jnp.zeros((SLAB_ROWS, SLAB_COLS), jnp.float32)
    slab = slab.at[0:H, 0:H].set(wk)
    slab = slab.at[0:H, H:2 * H].set(wv)
    slab = slab.at[0:H, 2 * H:3 * H].set(wo)
    slab = slab.at[0:H, 3 * H:4 * H].set(w1a)
    slab = slab.at[R_Q:R_Q + NUM_HEADS * C, 0:HEAD_DIM].set(q_heads)
    slab = slab.at[R_CH1:R_CH1 + C, 0:2 * HIDDEN].set(coin_h1)
    slab = slab.at[R_W2T:R_W2T + 2, 0:2 * HIDDEN].set(w2t)
    slab = slab.at[R_W2T, 2 * HIDDEN].set(b2p[0, 0])
    slab = slab.at[R_W2T + 1, 2 * HIDDEN].set(b2i[0, 0])
    slab = slab.at[R_BIAS, 0:H].set(bk[0])
    slab = slab.at[R_BIAS, H:2 * H].set(bv[0])
    slab = slab.at[R_BIAS, 2 * H:3 * H].set(bo[0])
    return slab


@jax.jit
def crypto_impact_forward(text_emb, slab):
    """Per-call hot path: one reshape + one pallas_call (2 input DMAs)."""
    text2d = text_emb.reshape(B * S, H)
    pres, imp = pl.pallas_call(
        crypto_impact_kernel,
        out_shape=(jax.ShapeDtypeStruct((B, C), jnp.float32),
                   jax.ShapeDtypeStruct((B, C), jnp.float32)),
        in_specs=[pl.BlockSpec(memory_space=pltpu.MemorySpace.VMEM),
                  pl.BlockSpec(memory_space=pltpu.MemorySpace.VMEM)],
        out_specs=(pl.BlockSpec(memory_space=pltpu.MemorySpace.VMEM),
                   pl.BlockSpec(memory_space=pltpu.MemorySpace.VMEM)),
    )(text2d, slab)
    return pres, imp


def reference_forward(text_emb, coin_emb, params):
    """Pure-JAX reference of the same math for validation."""
    (wq, bq, wk, bk, wv, bv, wo, bo,
     w1p, b1p, w2p, b2p, w1i, b1i, w2i, b2i) = params
    q = coin_emb @ wq + bq                                  # (C, H)
    k = jnp.einsum("bsh,hd->bsd", text_emb, wk) + bk        # (B, S, H)
    v = jnp.einsum("bsh,hd->bsd", text_emb, wv) + bv
    qh = q.reshape(C, NUM_HEADS, HEAD_DIM)
    kh = k.reshape(B, S, NUM_HEADS, HEAD_DIM)
    vh = v.reshape(B, S, NUM_HEADS, HEAD_DIM)
    s = jnp.einsum("cnd,bsnd->bncs", qh, kh) / math.sqrt(HEAD_DIM)
    p = jax.nn.softmax(s, axis=-1)
    o = jnp.einsum("bncs,bsnd->bcnd", p, vh).reshape(B, C, H)
    attn = o @ wo + bo
    coin_b = jnp.broadcast_to(coin_emb[None], (B, C, H))
    combined = jnp.concatenate([coin_b, attn], axis=-1)
    hp = jnp.maximum(combined @ w1p + b1p, 0.0)
    pres = jax.nn.sigmoid(hp @ w2p + b2p)[..., 0]
    hi = jnp.maximum(combined @ w1i + b1i, 0.0)
    imp = jnp.tanh(hi @ w2i + b2i)[..., 0] * 100.0
    return pres, imp


def init_params(key):
    ks = jax.random.split(key, 20)

    def w(k, shape, scale=0.05):
        return (scale * jax.random.normal(k, shape)).astype(jnp.float32)

    params = (
        w(ks[0], (H, H)), w(ks[1], (1, H)),                  # q proj
        w(ks[2], (H, H)), w(ks[3], (1, H)),                  # k proj
        w(ks[4], (H, H)), w(ks[5], (1, H)),                  # v proj
        w(ks[6], (H, H)), w(ks[7], (1, H)),                  # out proj
        w(ks[8], (2 * H, HIDDEN)), w(ks[9], (1, HIDDEN)),    # presence L1
        w(ks[10], (HIDDEN, 1)), w(ks[11], (1, 1)),           # presence L2
        w(ks[12], (2 * H, HIDDEN)), w(ks[13], (1, HIDDEN)),  # impact L1
        w(ks[14], (HIDDEN, 1)), w(ks[15], (1, 1)),           # impact L2
    )
    return params, ks[16], ks[17]


if __name__ == "__main__":
    key = jax.random.PRNGKey(0)
    params, k_text, k_coin = init_params(key)

    # Precomputed BERT last_hidden_state stand-in and the coin embedding table.
    text_emb = jax.random.normal(k_text, (B, S, H), dtype=jnp.float32)
    coin_table = (0.05 * jax.random.normal(k_coin, (C, H))).astype(jnp.float32)
    # coin_ids = arange(C): coin_names -> [0..C-1], so the lookup is the full table.
    coin_emb = coin_table

    # One-time weight packing (hoisted out of the per-call path).
    slab = jax.block_until_ready(prepare_inputs(coin_emb, params))

    presence, impact = crypto_impact_forward(text_emb, slab)
    jax.block_until_ready((presence, impact))

    pres_ref, imp_ref = reference_forward(text_emb, coin_emb, params)
    assert presence.shape == (B, C) and impact.shape == (B, C)
    assert jnp.allclose(presence, pres_ref, atol=1e-4, rtol=1e-4), "presence mismatch"
    assert jnp.allclose(impact, imp_ref, atol=1e-2, rtol=1e-4), "impact mismatch"

    print("KERNEL_OK")
</pallas_src>

<mosaic_0001>
module attributes {stable_mosaic.version = 11 : i64} {
  func.func @crypto_impact_kernel(%arg0: memref<16x64xf32, #tpu.memory_space<vmem>>, %arg1: memref<120x256xf32, #tpu.memory_space<vmem>>, %arg2: memref<2x8xf32, #tpu.memory_space<vmem>>, %arg3: memref<2x8xf32, #tpu.memory_space<vmem>>) attributes {dimension_semantics = [], scalar_prefetch = 0 : i64, scratch_operands = 0 : i64, tpu.core_type = #tpu.core_type<tc>} {
    %c0 = arith.constant 0 : index
    %c0_0 = arith.constant 0 : index
    %0 = vector.load %arg0[%c0, %c0_0] : memref<16x64xf32, #tpu.memory_space<vmem>>, vector<16x64xf32>
    %c0_1 = arith.constant 0 : index
    %c0_2 = arith.constant 0 : index
    %1 = vector.load %arg1[%c0_1, %c0_2] : memref<120x256xf32, #tpu.memory_space<vmem>>, vector<64x128xf32>
    %cst = arith.constant dense<0.000000e+00> : vector<16x128xf32>
    %2 = tpu.matmul %0, %1, %cst {dimension_numbers = #tpu.dot_dimension_numbers<[1], [0], [0], [1], [0, 0, 1, 1], [], []>} : vector<16x64xf32>, vector<64x128xf32>, vector<16x128xf32> -> vector<16x128xf32>
    %c112 = arith.constant 112 : index
    %c0_3 = arith.constant 0 : index
    %3 = vector.load %arg1[%c112, %c0_3] : memref<120x256xf32, #tpu.memory_space<vmem>>, vector<1x128xf32>
    %4 = vector.broadcast %3 : vector<1x128xf32> to vector<16x128xf32>
    %5 = arith.addf %2, %4 : vector<16x128xf32>
    %c0_4 = arith.constant 0 : index
    %c128 = arith.constant 128 : index
    %6 = vector.load %arg1[%c0_4, %c128] : memref<120x256xf32, #tpu.memory_space<vmem>>, vector<64x64xf32>
    %c0_5 = arith.constant 0 : index
    %c192 = arith.constant 192 : index
    %7 = vector.load %arg1[%c0_5, %c192] : memref<120x256xf32, #tpu.memory_space<vmem>>, vector<64x64xf32>
    %c112_6 = arith.constant 112 : index
    %c128_7 = arith.constant 128 : index
    %8 = vector.load %arg1[%c112_6, %c128_7] : memref<120x256xf32, #tpu.memory_space<vmem>>, vector<1x64xf32>
    %c96 = arith.constant 96 : index
    %c0_8 = arith.constant 0 : index
    %9 = vector.load %arg1[%c96, %c0_8] : memref<120x256xf32, #tpu.memory_space<vmem>>, vector<8x64xf32>
    %c104 = arith.constant 104 : index
    %c0_9 = arith.constant 0 : index
    %10 = vector.load %arg1[%c104, %c0_9] : memref<120x256xf32, #tpu.memory_space<vmem>>, vector<2x64xf32>
    %c104_10 = arith.constant 104 : index
    %c64 = arith.constant 64 : index
    %11 = vector.load %arg1[%c104_10, %c64] : memref<120x256xf32, #tpu.memory_space<vmem>>, vector<2x1xf32>
    %c64_11 = arith.constant 64 : index
    %c0_12 = arith.constant 0 : index
    %12 = vector.load %arg1[%c64_11, %c0_12] : memref<120x256xf32, #tpu.memory_space<vmem>>, vector<8x16xf32>
    %c72 = arith.constant 72 : index
    %c0_13 = arith.constant 0 : index
    %13 = vector.load %arg1[%c72, %c0_13] : memref<120x256xf32, #tpu.memory_space<vmem>>, vector<8x16xf32>
    %c80 = arith.constant 80 : index
    %c0_14 = arith.constant 0 : index
    %14 = vector.load %arg1[%c80, %c0_14] : memref<120x256xf32, #tpu.memory_space<vmem>>, vector<8x16xf32>
    %c88 = arith.constant 88 : index
    %c0_15 = arith.constant 0 : index
    %15 = vector.load %arg1[%c88, %c0_15] : memref<120x256xf32, #tpu.memory_space<vmem>>, vector<8x16xf32>
    %16 = vector.extract_strided_slice %5 {offsets = [0, 0], sizes = [8, 64], strides = [1, 1]} : vector<16x128xf32> to vector<8x64xf32>
    %17 = vector.extract_strided_slice %5 {offsets = [0, 64], sizes = [8, 64], strides = [1, 1]} : vector<16x128xf32> to vector<8x64xf32>
    %18 = vector.extract_strided_slice %16 {offsets = [0, 0], sizes = [8, 16], strides = [1, 1]} : vector<8x64xf32> to vector<8x16xf32>
    %19 = vector.extract_strided_slice %17 {offsets = [0, 0], sizes = [8, 16], strides = [1, 1]} : vector<8x64xf32> to vector<8x16xf32>
    %cst_16 = arith.constant dense<0.000000e+00> : vector<8x8xf32>
    %20 = tpu.matmul %12, %18, %cst_16 {dimension_numbers = #tpu.dot_dimension_numbers<[1], [1], [0], [0], [0, 0, 1, 0], [], []>} : vector<8x16xf32>, vector<8x16xf32>, vector<8x8xf32> -> vector<8x8xf32>
    %cst_17 = arith.constant dense<0xFF800000> : vector<8xf32>
    %21 = vector.multi_reduction <maximumf>, %20, %cst_17 [1] : vector<8x8xf32> to vector<8xf32>
    %22 = vector.shape_cast %21 : vector<8xf32> to vector<8x1xf32>
    %23 = vector.broadcast %22 : vector<8x1xf32> to vector<8x8xf32>
    %24 = arith.subf %20, %23 : vector<8x8xf32>
    %25 = math.exp %24 : vector<8x8xf32>
    %cst_18 = arith.constant dense<0.000000e+00> : vector<8xf32>
    %26 = vector.multi_reduction <add>, %25, %cst_18 [1] : vector<8x8xf32> to vector<8xf32>
    %27 = vector.shape_cast %26 : vector<8xf32> to vector<8x1xf32>
    %28 = vector.broadcast %27 : vector<8x1xf32> to vector<8x8xf32>
    %29 = arith.divf %25, %28 : vector<8x8xf32>
    %cst_19 = arith.constant dense<0.000000e+00> : vector<8x16xf32>
    %30 = tpu.matmul %29, %19, %cst_19 {dimension_numbers = #tpu.dot_dimension_numbers<[1], [0], [0], [1], [0, 0, 1, 1], [], []>} : vector<8x8xf32>, vector<8x16xf32>, vector<8x16xf32> -> vector<8x16xf32>
    %31 = vector.extract_strided_slice %16 {offsets = [0, 16], sizes = [8, 16], strides = [1, 1]} : vector<8x64xf32> to vector<8x16xf32>
    %32 = vector.extract_strided_slice %17 {offsets = [0, 16], sizes = [8, 16], strides = [1, 1]} : vector<8x64xf32> to vector<8x16xf32>
    %cst_20 = arith.constant dense<0.000000e+00> : vector<8x8xf32>
    %33 = tpu.matmul %13, %31, %cst_20 {dimension_numbers = #tpu.dot_dimension_numbers<[1], [1], [0], [0], [0, 0, 1, 0], [], []>} : vector<8x16xf32>, vector<8x16xf32>, vector<8x8xf32> -> vector<8x8xf32>
    %cst_21 = arith.constant dense<0xFF800000> : vector<8xf32>
    %34 = vector.multi_reduction <maximumf>, %33, %cst_21 [1] : vector<8x8xf32> to vector<8xf32>
    %35 = vector.shape_cast %34 : vector<8xf32> to vector<8x1xf32>
    %36 = vector.broadcast %35 : vector<8x1xf32> to vector<8x8xf32>
    %37 = arith.subf %33, %36 : vector<8x8xf32>
    %38 = math.exp %37 : vector<8x8xf32>
    %cst_22 = arith.constant dense<0.000000e+00> : vector<8xf32>
    %39 = vector.multi_reduction <add>, %38, %cst_22 [1] : vector<8x8xf32> to vector<8xf32>
    %40 = vector.shape_cast %39 : vector<8xf32> to vector<8x1xf32>
    %41 = vector.broadcast %40 : vector<8x1xf32> to vector<8x8xf32>
    %42 = arith.divf %38, %41 : vector<8x8xf32>
    %cst_23 = arith.constant dense<0.000000e+00> : vector<8x16xf32>
    %43 = tpu.matmul %42, %32, %cst_23 {dimension_numbers = #tpu.dot_dimension_numbers<[1], [0], [0], [1], [0, 0, 1, 1], [], []>} : vector<8x8xf32>, vector<8x16xf32>, vector<8x16xf32> -> vector<8x16xf32>
    %44 = vector.extract_strided_slice %16 {offsets = [0, 32], sizes = [8, 16], strides = [1, 1]} : vector<8x64xf32> to vector<8x16xf32>
    %45 = vector.extract_strided_slice %17 {offsets = [0, 32], sizes = [8, 16], strides = [1, 1]} : vector<8x64xf32> to vector<8x16xf32>
    %cst_24 = arith.constant dense<0.000000e+00> : vector<8x8xf32>
    %46 = tpu.matmul %14, %44, %cst_24 {dimension_numbers = #tpu.dot_dimension_numbers<[1], [1], [0], [0], [0, 0, 1, 0], [], []>} : vector<8x16xf32>, vector<8x16xf32>, vector<8x8xf32> -> vector<8x8xf32>
    %cst_25 = arith.constant dense<0xFF800000> : vector<8xf32>
    %47 = vector.multi_reduction <maximumf>, %46, %cst_25 [1] : vector<8x8xf32> to vector<8xf32>
    %48 = vector.shape_cast %47 : vector<8xf32> to vector<8x1xf32>
    %49 = vector.broadcast %48 : vector<8x1xf32> to vector<8x8xf32>
    %50 = arith.subf %46, %49 : vector<8x8xf32>
    %51 = math.exp %50 : vector<8x8xf32>
    %cst_26 = arith.constant dense<0.000000e+00> : vector<8xf32>
    %52 = vector.multi_reduction <add>, %51, %cst_26 [1] : vector<8x8xf32> to vector<8xf32>
    %53 = vector.shape_cast %52 : vector<8xf32> to vector<8x1xf32>
    %54 = vector.broadcast %53 : vector<8x1xf32> to vector<8x8xf32>
    %55 = arith.divf %51, %54 : vector<8x8xf32>
    %cst_27 = arith.constant dense<0.000000e+00> : vector<8x16xf32>
    %56 = tpu.matmul %55, %45, %cst_27 {dimension_numbers = #tpu.dot_dimension_numbers<[1], [0], [0], [1], [0, 0, 1, 1], [], []>} : vector<8x8xf32>, vector<8x16xf32>, vector<8x16xf32> -> vector<8x16xf32>
    %57 = vector.extract_strided_slice %16 {offsets = [0, 48], sizes = [8, 16], strides = [1, 1]} : vector<8x64xf32> to vector<8x16xf32>
    %58 = vector.extract_strided_slice %17 {offsets = [0, 48], sizes = [8, 16], strides = [1, 1]} : vector<8x64xf32> to vector<8x16xf32>
    %cst_28 = arith.constant dense<0.000000e+00> : vector<8x8xf32>
    %59 = tpu.matmul %15, %57, %cst_28 {dimension_numbers = #tpu.dot_dimension_numbers<[1], [1], [0], [0], [0, 0, 1, 0], [], []>} : vector<8x16xf32>, vector<8x16xf32>, vector<8x8xf32> -> vector<8x8xf32>
    %cst_29 = arith.constant dense<0xFF800000> : vector<8xf32>
    %60 = vector.multi_reduction <maximumf>, %59, %cst_29 [1] : vector<8x8xf32> to vector<8xf32>
    %61 = vector.shape_cast %60 : vector<8xf32> to vector<8x1xf32>
    %62 = vector.broadcast %61 : vector<8x1xf32> to vector<8x8xf32>
    %63 = arith.subf %59, %62 : vector<8x8xf32>
    %64 = math.exp %63 : vector<8x8xf32>
    %cst_30 = arith.constant dense<0.000000e+00> : vector<8xf32>
    %65 = vector.multi_reduction <add>, %64, %cst_30 [1] : vector<8x8xf32> to vector<8xf32>
    %66 = vector.shape_cast %65 : vector<8xf32> to vector<8x1xf32>
    %67 = vector.broadcast %66 : vector<8x1xf32> to vector<8x8xf32>
    %68 = arith.divf %64, %67 : vector<8x8xf32>
    %cst_31 = arith.constant dense<0.000000e+00> : vector<8x16xf32>
    %69 = tpu.matmul %68, %58, %cst_31 {dimension_numbers = #tpu.dot_dimension_numbers<[1], [0], [0], [1], [0, 0, 1, 1], [], []>} : vector<8x8xf32>, vector<8x16xf32>, vector<8x16xf32> -> vector<8x16xf32>
    %70 = tpu.concatenate %30, %43, %56, %69 in 1 : vector<8x16xf32>, vector<8x16xf32>, vector<8x16xf32>, vector<8x16xf32> -> vector<8x64xf32>
    %cst_32 = arith.constant dense<0.000000e+00> : vector<8x64xf32>
    %71 = tpu.matmul %70, %6, %cst_32 {dimension_numbers = #tpu.dot_dimension_numbers<[1], [0], [0], [1], [0, 0, 1, 1], [], []>} : vector<8x64xf32>, vector<64x64xf32>, vector<8x64xf32> -> vector<8x64xf32>
    %72 = vector.broadcast %8 : vector<1x64xf32> to vector<8x64xf32>
    %73 = arith.addf %71, %72 : vector<8x64xf32>
    %cst_33 = arith.constant dense<0.000000e+00> : vector<8x64xf32>
    %74 = tpu.matmul %73, %7, %cst_33 {dimension_numbers = #tpu.dot_dimension_numbers<[1], [0], [0], [1], [0, 0, 1, 1], [], []>} : vector<8x64xf32>, vector<64x64xf32>, vector<8x64xf32> -> vector<8x64xf32>
    %75 = arith.addf %9, %74 : vector<8x64xf32>
    %cst_34 = arith.constant 0.000000e+00 : f32
    %76 = vector.broadcast %cst_34 : f32 to vector<8x64xf32>
    %77 = arith.maximumf %75, %76 : vector<8x64xf32>
    %cst_35 = arith.constant dense<0.000000e+00> : vector<2x8xf32>
    %78 = tpu.matmul %10, %77, %cst_35 {dimension_numbers = #tpu.dot_dimension_numbers<[1], [1], [0], [0], [0, 0, 1, 0], [], []>} : vector<2x64xf32>, vector<8x64xf32>, vector<2x8xf32> -> vector<2x8xf32>
    %79 = vector.broadcast %11 : vector<2x1xf32> to vector<2x8xf32>
    %80 = arith.addf %78, %79 : vector<2x8xf32>
    %81 = vector.extract_strided_slice %80 {offsets = [0, 0], sizes = [1, 8], strides = [1, 1]} : vector<2x8xf32> to vector<1x8xf32>
    %82 = arith.negf %81 : vector<1x8xf32>
    %83 = math.exp %82 : vector<1x8xf32>
    %cst_36 = arith.constant 1.000000e+00 : f32
    %84 = vector.broadcast %cst_36 : f32 to vector<1x8xf32>
    %85 = arith.addf %84, %83 : vector<1x8xf32>
    %86 = arith.divf %84, %85 : vector<1x8xf32>
    %c0_37 = arith.constant 0 : index
    %c0_38 = arith.constant 0 : index
    %87 = vector.load %arg2[%c0_37, %c0_38] : memref<2x8xf32, #tpu.memory_space<vmem>>, vector<1x8xf32>
    tpu.vector_store %arg2[%c0_37, %c0_38], %86 {strides = array<i32>} : memref<2x8xf32, #tpu.memory_space<vmem>>, vector<1x8xf32>,
    %88 = vector.extract_strided_slice %80 {offsets = [1, 0], sizes = [1, 8], strides = [1, 1]} : vector<2x8xf32> to vector<1x8xf32>
    %89 = math.tanh %88 : vector<1x8xf32>
    %cst_39 = arith.constant 1.000000e+02 : f32
    %90 = vector.broadcast %cst_39 : f32 to vector<1x8xf32>
    %91 = arith.mulf %90, %89 : vector<1x8xf32>
    %c0_40 = arith.constant 0 : index
    %c0_41 = arith.constant 0 : index
    %92 = vector.load %arg3[%c0_40, %c0_41] : memref<2x8xf32, #tpu.memory_space<vmem>>, vector<1x8xf32>
    tpu.vector_store %arg3[%c0_40, %c0_41], %91 {strides = array<i32>} : memref<2x8xf32, #tpu.memory_space<vmem>>, vector<1x8xf32>,
    %93 = vector.extract_strided_slice %5 {offsets = [8, 0], sizes = [8, 64], strides = [1, 1]} : vector<16x128xf32> to vector<8x64xf32>
    %94 = vector.extract_strided_slice %5 {offsets = [8, 64], sizes = [8, 64], strides = [1, 1]} : vector<16x128xf32> to vector<8x64xf32>
    %95 = vector.extract_strided_slice %93 {offsets = [0, 0], sizes = [8, 16], strides = [1, 1]} : vector<8x64xf32> to vector<8x16xf32>
    %96 = vector.extract_strided_slice %94 {offsets = [0, 0], sizes = [8, 16], strides = [1, 1]} : vector<8x64xf32> to vector<8x16xf32>
    %cst_42 = arith.constant dense<0.000000e+00> : vector<8x8xf32>
    %97 = tpu.matmul %12, %95, %cst_42 {dimension_numbers = #tpu.dot_dimension_numbers<[1], [1], [0], [0], [0, 0, 1, 0], [], []>} : vector<8x16xf32>, vector<8x16xf32>, vector<8x8xf32> -> vector<8x8xf32>
    %cst_43 = arith.constant dense<0xFF800000> : vector<8xf32>
    %98 = vector.multi_reduction <maximumf>, %97, %cst_43 [1] : vector<8x8xf32> to vector<8xf32>
    %99 = vector.shape_cast %98 : vector<8xf32> to vector<8x1xf32>
    %100 = vector.broadcast %99 : vector<8x1xf32> to vector<8x8xf32>
    %101 = arith.subf %97, %100 : vector<8x8xf32>
    %102 = math.exp %101 : vector<8x8xf32>
    %cst_44 = arith.constant dense<0.000000e+00> : vector<8xf32>
    %103 = vector.multi_reduction <add>, %102, %cst_44 [1] : vector<8x8xf32> to vector<8xf32>
    %104 = vector.shape_cast %103 : vector<8xf32> to vector<8x1xf32>
    %105 = vector.broadcast %104 : vector<8x1xf32> to vector<8x8xf32>
    %106 = arith.divf %102, %105 : vector<8x8xf32>
    %cst_45 = arith.constant dense<0.000000e+00> : vector<8x16xf32>
    %107 = tpu.matmul %106, %96, %cst_45 {dimension_numbers = #tpu.dot_dimension_numbers<[1], [0], [0], [1], [0, 0, 1, 1], [], []>} : vector<8x8xf32>, vector<8x16xf32>, vector<8x16xf32> -> vector<8x16xf32>
    %108 = vector.extract_strided_slice %93 {offsets = [0, 16], sizes = [8, 16], strides = [1, 1]} : vector<8x64xf32> to vector<8x16xf32>
    %109 = vector.extract_strided_slice %94 {offsets = [0, 16], sizes = [8, 16], strides = [1, 1]} : vector<8x64xf32> to vector<8x16xf32>
    %cst_46 = arith.constant dense<0.000000e+00> : vector<8x8xf32>
    %110 = tpu.matmul %13, %108, %cst_46 {dimension_numbers = #tpu.dot_dimension_numbers<[1], [1], [0], [0], [0, 0, 1, 0], [], []>} : vector<8x16xf32>, vector<8x16xf32>, vector<8x8xf32> -> vector<8x8xf32>
    %cst_47 = arith.constant dense<0xFF800000> : vector<8xf32>
    %111 = vector.multi_reduction <maximumf>, %110, %cst_47 [1] : vector<8x8xf32> to vector<8xf32>
    %112 = vector.shape_cast %111 : vector<8xf32> to vector<8x1xf32>
    %113 = vector.broadcast %112 : vector<8x1xf32> to vector<8x8xf32>
    %114 = arith.subf %110, %113 : vector<8x8xf32>
    %115 = math.exp %114 : vector<8x8xf32>
    %cst_48 = arith.constant dense<0.000000e+00> : vector<8xf32>
    %116 = vector.multi_reduction <add>, %115, %cst_48 [1] : vector<8x8xf32> to vector<8xf32>
    %117 = vector.shape_cast %116 : vector<8xf32> to vector<8x1xf32>
    %118 = vector.broadcast %117 : vector<8x1xf32> to vector<8x8xf32>
    %119 = arith.divf %115, %118 : vector<8x8xf32>
    %cst_49 = arith.constant dense<0.000000e+00> : vector<8x16xf32>
    %120 = tpu.matmul %119, %109, %cst_49 {dimension_numbers = #tpu.dot_dimension_numbers<[1], [0], [0], [1], [0, 0, 1, 1], [], []>} : vector<8x8xf32>, vector<8x16xf32>, vector<8x16xf32> -> vector<8x16xf32>
    %121 = vector.extract_strided_slice %93 {offsets = [0, 32], sizes = [8, 16], strides = [1, 1]} : vector<8x64xf32> to vector<8x16xf32>
    %122 = vector.extract_strided_slice %94 {offsets = [0, 32], sizes = [8, 16], strides = [1, 1]} : vector<8x64xf32> to vector<8x16xf32>
    %cst_50 = arith.constant dense<0.000000e+00> : vector<8x8xf32>
    %123 = tpu.matmul %14, %121, %cst_50 {dimension_numbers = #tpu.dot_dimension_numbers<[1], [1], [0], [0], [0, 0, 1, 0], [], []>} : vector<8x16xf32>, vector<8x16xf32>, vector<8x8xf32> -> vector<8x8xf32>
    %cst_51 = arith.constant dense<0xFF800000> : vector<8xf32>
    %124 = vector.multi_reduction <maximumf>, %123, %cst_51 [1] : vector<8x8xf32> to vector<8xf32>
    %125 = vector.shape_cast %124 : vector<8xf32> to vector<8x1xf32>
    %126 = vector.broadcast %125 : vector<8x1xf32> to vector<8x8xf32>
    %127 = arith.subf %123, %126 : vector<8x8xf32>
    %128 = math.exp %127 : vector<8x8xf32>
    %cst_52 = arith.constant dense<0.000000e+00> : vector<8xf32>
    %129 = vector.multi_reduction <add>, %128, %cst_52 [1] : vector<8x8xf32> to vector<8xf32>
    %130 = vector.shape_cast %129 : vector<8xf32> to vector<8x1xf32>
    %131 = vector.broadcast %130 : vector<8x1xf32> to vector<8x8xf32>
    %132 = arith.divf %128, %131 : vector<8x8xf32>
    %cst_53 = arith.constant dense<0.000000e+00> : vector<8x16xf32>
    %133 = tpu.matmul %132, %122, %cst_53 {dimension_numbers = #tpu.dot_dimension_numbers<[1], [0], [0], [1], [0, 0, 1, 1], [], []>} : vector<8x8xf32>, vector<8x16xf32>, vector<8x16xf32> -> vector<8x16xf32>
    %134 = vector.extract_strided_slice %93 {offsets = [0, 48], sizes = [8, 16], strides = [1, 1]} : vector<8x64xf32> to vector<8x16xf32>
    %135 = vector.extract_strided_slice %94 {offsets = [0, 48], sizes = [8, 16], strides = [1, 1]} : vector<8x64xf32> to vector<8x16xf32>
    %cst_54 = arith.constant dense<0.000000e+00> : vector<8x8xf32>
    %136 = tpu.matmul %15, %134, %cst_54 {dimension_numbers = #tpu.dot_dimension_numbers<[1], [1], [0], [0], [0, 0, 1, 0], [], []>} : vector<8x16xf32>, vector<8x16xf32>, vector<8x8xf32> -> vector<8x8xf32>
    %cst_55 = arith.constant dense<0xFF800000> : vector<8xf32>
    %137 = vector.multi_reduction <maximumf>, %136, %cst_55 [1] : vector<8x8xf32> to vector<8xf32>
    %138 = vector.shape_cast %137 : vector<8xf32> to vector<8x1xf32>
    %139 = vector.broadcast %138 : vector<8x1xf32> to vector<8x8xf32>
    %140 = arith.subf %136, %139 : vector<8x8xf32>
    %141 = math.exp %140 : vector<8x8xf32>
    %cst_56 = arith.constant dense<0.000000e+00> : vector<8xf32>
    %142 = vector.multi_reduction <add>, %141, %cst_56 [1] : vector<8x8xf32> to vector<8xf32>
    %143 = vector.shape_cast %142 : vector<8xf32> to vector<8x1xf32>
    %144 = vector.broadcast %143 : vector<8x1xf32> to vector<8x8xf32>
    %145 = arith.divf %141, %144 : vector<8x8xf32>
    %cst_57 = arith.constant dense<0.000000e+00> : vector<8x16xf32>
    %146 = tpu.matmul %145, %135, %cst_57 {dimension_numbers = #tpu.dot_dimension_numbers<[1], [0], [0], [1], [0, 0, 1, 1], [], []>} : vector<8x8xf32>, vector<8x16xf32>, vector<8x16xf32> -> vector<8x16xf32>
    %147 = tpu.concatenate %107, %120, %133, %146 in 1 : vector<8x16xf32>, vector<8x16xf32>, vector<8x16xf32>, vector<8x16xf32> -> vector<8x64xf32>
    %cst_58 = arith.constant dense<0.000000e+00> : vector<8x64xf32>
    %148 = tpu.matmul %147, %6, %cst_58 {dimension_numbers = #tpu.dot_dimension_numbers<[1], [0], [0], [1], [0, 0, 1, 1], [], []>} : vector<8x64xf32>, vector<64x64xf32>, vector<8x64xf32> -> vector<8x64xf32>
    %149 = vector.broadcast %8 : vector<1x64xf32> to vector<8x64xf32>
    %150 = arith.addf %148, %149 : vector<8x64xf32>
    %cst_59 = arith.constant dense<0.000000e+00> : vector<8x64xf32>
    %151 = tpu.matmul %150, %7, %cst_59 {dimension_numbers = #tpu.dot_dimension_numbers<[1], [0], [0], [1], [0, 0, 1, 1], [], []>} : vector<8x64xf32>, vector<64x64xf32>, vector<8x64xf32> -> vector<8x64xf32>
    %152 = arith.addf %9, %151 : vector<8x64xf32>
    %cst_60 = arith.constant 0.000000e+00 : f32
    %153 = vector.broadcast %cst_60 : f32 to vector<8x64xf32>
    %154 = arith.maximumf %152, %153 : vector<8x64xf32>
    %cst_61 = arith.constant dense<0.000000e+00> : vector<2x8xf32>
    %155 = tpu.matmul %10, %154, %cst_61 {dimension_numbers = #tpu.dot_dimension_numbers<[1], [1], [0], [0], [0, 0, 1, 0], [], []>} : vector<2x64xf32>, vector<8x64xf32>, vector<2x8xf32> -> vector<2x8xf32>
    %156 = vector.broadcast %11 : vector<2x1xf32> to vector<2x8xf32>
    %157 = arith.addf %155, %156 : vector<2x8xf32>
    %158 = vector.extract_strided_slice %157 {offsets = [0, 0], sizes = [1, 8], strides = [1, 1]} : vector<2x8xf32> to vector<1x8xf32>
    %159 = arith.negf %158 : vector<1x8xf32>
    %160 = math.exp %159 : vector<1x8xf32>
    %cst_62 = arith.constant 1.000000e+00 : f32
    %161 = vector.broadcast %cst_62 : f32 to vector<1x8xf32>
    %162 = arith.addf %161, %160 : vector<1x8xf32>
    %163 = arith.divf %161, %162 : vector<1x8xf32>
    %c1 = arith.constant 1 : index
    %c0_63 = arith.constant 0 : index
    %164 = vector.load %arg2[%c1, %c0_63] : memref<2x8xf32, #tpu.memory_space<vmem>>, vector<1x8xf32>
    tpu.vector_store %arg2[%c1, %c0_63], %163 {strides = array<i32>} : memref<2x8xf32, #tpu.memory_space<vmem>>, vector<1x8xf32>,
    %165 = vector.extract_strided_slice %157 {offsets = [1, 0], sizes = [1, 8], strides = [1, 1]} : vector<2x8xf32> to vector<1x8xf32>
    %166 = math.tanh %165 : vector<1x8xf32>
    %cst_64 = arith.constant 1.000000e+02 : f32
    %167 = vector.broadcast %cst_64 : f32 to vector<1x8xf32>
    %168 = arith.mulf %167, %166 : vector<1x8xf32>
    %c1_65 = arith.constant 1 : index
    %c0_66 = arith.constant 0 : index
    %169 = vector.load %arg3[%c1_65, %c0_66] : memref<2x8xf32, #tpu.memory_space<vmem>>, vector<1x8xf32>
    tpu.vector_store %arg3[%c1_65, %c0_66], %168 {strides = array<i32>} : memref<2x8xf32, #tpu.memory_space<vmem>>, vector<1x8xf32>,
    return
  }
}

</mosaic_0001>

<llo_original>
// kernel: crypto_impact_forward.1
$region0: #{crypto_impact_forward.1}
  #allocation0 [shape = 'u32[]', space=smem, size = 0x4, offset = 0x4, fixed_abs, tag = 'smem constant byte address 0x4 - core index']
  #allocation1 [shape = 'u32[144,128]{1,0:T(1,128)}', space=vmem, size = 0x12000, scoped, tag = 'internal scratch']
  %s0 = inlined_call_operand.hbm [shape: f32[16,64], index: 0, kind: input, shape index: {}]
  %s1 = inlined_call_operand.hbm [shape: f32[120,256], index: 1, kind: input, shape index: {}]
  %s2 = inlined_call_operand.hbm [shape: f32[2,8], index: 2, kind: output, shape index: {0}]
  %s3 = inlined_call_operand.hbm [shape: f32[2,8], index: 3, kind: output, shape index: {1}]
  %4 = xla_tuple %s2, %s3
  %s5 = sld [smem:[#allocation0]]
  $region34: #{crypto_impact_forward.1} parent=0
    _
  %s7 = ssub.s32 1, %s5
  %s8 = scalar_select 0, %s7, %s5
  $region1: #{crypto_impact_forward.1} parent=0
    #allocation2 [shape = 'u8[8192]{0}', space=vmem, size = 0x2000, scoped, tag = 'input window, operand 0, single buffered']
    #allocation3 [shape = 's32[1]{0}', space=sflag, size = 0x4, scoped, tag = 'scoped memory for crypto_impact_forward.1']
    #allocation4 [shape = 's32[1]{0}', space=sflag, size = 0x4, scoped, tag = 'scoped memory for crypto_impact_forward.1']
    #allocation5 [shape = 'u8[122880]{0}', space=vmem, size = 0x1e000, scoped, tag = 'input window, operand 1, single buffered']
    #allocation6 [shape = 's32[1]{0}', space=sflag, size = 0x4, scoped, tag = 'scoped memory for crypto_impact_forward.1']
    #allocation7 [shape = 'u8[1024]{0}', space=vmem, size = 0x400, scoped, tag = 'output window, operand 0, single buffered']
    #allocation8 [shape = 'u8[1024]{0}', space=vmem, size = 0x400, scoped, tag = 'output window, operand 1, single buffered']
    #allocation9 [shape = 's32[1]{0}', space=sflag, size = 0x4, scoped, tag = 'scoped memory for crypto_impact_forward.1']
    %9 = vsyncpa [#allocation3], 0
    %10 = vsyncpa [#allocation6], 0
    %11 = vsyncpa [#allocation4], 0
    %12 = vsyncpa [#allocation9], 0
    // Predicated region
    $region2: #{crypto_impact_forward.1} parent=1 // pred_check
      _
    $region3: #{crypto_impact_forward.1} parent=1 // pred_check_branch
      %14 = sbr.rel (0) target = $region5
    $region4: #{crypto_impact_forward.1} parent=1 // pred_region
      %s16 = ssub.s32 256, 256
      %17 = vsyncadd [#allocation3], %s16
      %s18 = sshll.u32 [#allocation2], 4
      %s19 = int_to_ptr.vmem [resolvable:$true] %s18
      %24 = dma.hbm_to_vmem [thread:$0]  %s0, 256, %s19, [#allocation3], 128, 128, 8
    $region5: #{crypto_impact_forward.1} parent=1 // pred_fallthru
      _
    // Predicated region
    $region6: #{crypto_impact_forward.1} parent=1 // pred_check
      _
    $region7: #{crypto_impact_forward.1} parent=1 // pred_check_branch
      %26 = sbr.rel (0) target = $region9
    $region8: #{crypto_impact_forward.1} parent=1 // pred_region
      %s28 = ssub.s32 3840, 3840
      %29 = vsyncadd [#allocation6], %s28
      %s30 = sshll.u32 [#allocation5], 4
      %s31 = int_to_ptr.vmem [resolvable:$true] %s30
      %36 = dma.hbm_to_vmem [thread:$0]  %s1, 3840, %s31, [#allocation6], 256, 256, 16
    $region9: #{crypto_impact_forward.1} parent=1 // pred_fallthru
      _
    // Predicated region
    $region10: #{crypto_impact_forward.1} parent=1 // pred_check
      _
    $region11: #{crypto_impact_forward.1} parent=1 // pred_check_branch
      %38 = sbr.rel (0) target = $region13
    $region12: #{crypto_impact_forward.1} parent=1 // pred_region
      %39 = dma.done [#allocation3], 256
    $region13: #{crypto_impact_forward.1} parent=1 // pred_fallthru
      _
    // Predicated region
    $region14: #{crypto_impact_forward.1} parent=1 // pred_check
      _
    $region15: #{crypto_impact_forward.1} parent=1 // pred_check_branch
      %41 = sbr.rel (0) target = $region17
    $region16: #{crypto_impact_forward.1} parent=1 // pred_region
      %42 = dma.done [#allocation6], 3840
    $region17: #{crypto_impact_forward.1} parent=1 // pred_fallthru
      _
    %v43 = vld [vmem:[#allocation2] sm:$0xff]
    %v44 = vld [vmem:[#allocation2 + $0x8] sm:$0xff]
    %v45 = vld [vmem:[#allocation5] sm:$0xff]
    %v46 = vld [vmem:[#allocation5 + $0x10] sm:$0xff]
    %v47 = vld [vmem:[#allocation5 + $0x20] sm:$0xff]
    %v48 = vld [vmem:[#allocation5 + $0x30] sm:$0xff]
    %v49 = vld [vmem:[#allocation5 + $0x40] sm:$0xff]
    %v50 = vld [vmem:[#allocation5 + $0x50] sm:$0xff]
    %v51 = vld [vmem:[#allocation5 + $0x60] sm:$0xff]
    %v52 = vld [vmem:[#allocation5 + $0x70] sm:$0xff]
    %v53 = vld [vmem:[#allocation5 + $0xe0] ss:$0 sm:$0xff]
    %vm54 = vcmask 523264
    %v56 = vsel %vm54, %v43, 0
    %v59 = vsel %vm54, %v44, 0
    %61 = vmatprep.subr.mxu0 0.0
    %62 = vmatpush1.msra.mxu0 0.0
    %63 = vmatprep.subr.mxu0 0.0
    %64 = vmatpush1.msra.mxu0 0.0
    %65 = vmatprep.subr.mxu0 0.0
    %66 = vmatpush1.msra.mxu0 0.0
    %67 = vmatprep.subr.mxu0 0.0
    %68 = vmatpush1.msra.mxu0 0.0
    %69 = vmatprep.subr.mxu0 0.0
    %70 = vmatpush1.msra.mxu0 0.0
    %71 = vmatprep.subr.mxu0 0.0
    %72 = vmatpush1.msra.mxu0 0.0
    %73 = vmatprep.subr.mxu0 0.0
    %74 = vmatpush1.msra.mxu0 0.0
    %75 = vmatprep.subr.mxu0 0.0
    %76 = vmatpush1.msra.mxu0 0.0
    %77 = vmatprep.subr.mxu0 0.0
    %78 = vmatpush1.msra.mxu0 %v52
    %79 = vmatprep.subr.mxu0 0.0
    %80 = vmatpush1.msra.mxu0 %v51
    %81 = vmatprep.subr.mxu0 0.0
    %82 = vmatpush1.msra.mxu0 %v50
    %83 = vmatprep.subr.mxu0 0.0
    %84 = vmatpush1.msra.mxu0 %v49
    %85 = vmatprep.subr.mxu0 0.0
    %86 = vmatpush1.msra.mxu0 %v48
    %87 = vmatprep.subr.mxu0 0.0
    %88 = vmatpush1.msra.mxu0 %v47
    %89 = vmatprep.subr.mxu0 0.0
    %90 = vmatpush1.msra.mxu0 %v46
    %91 = vmatprep.subr.mxu0 0.0
    %92 = vmatpush1.msra.mxu0 %v45
    %93 = vmatprep.subr.mxu0 0.0
    %94 = vmatpush2.msra.mxu0 0.0
    %95 = vmatprep.subr.mxu0 0.0
    %96 = vmatpush2.msra.mxu0 0.0
    %97 = vmatprep.subr.mxu0 0.0
    %98 = vmatpush2.msra.mxu0 0.0
    %99 = vmatprep.subr.mxu0 0.0
    %100 = vmatpush2.msra.mxu0 0.0
    %101 = vmatprep.subr.mxu0 0.0
    %102 = vmatpush2.msra.mxu0 0.0
    %103 = vmatprep.subr.mxu0 0.0
    %104 = vmatpush2.msra.mxu0 0.0
    %105 = vmatprep.subr.mxu0 0.0
    %106 = vmatpush2.msra.mxu0 0.0
    %107 = vmatprep.subr.mxu0 0.0
    %108 = vmatpush2.msra.mxu0 0.0
    %109 = vmatprep.subr.mxu0 0.0
    %110 = vmatpush2.msra.mxu0 0.0
    %111 = vmatprep.subr.mxu0 0.0
    %112 = vmatpush2.msra.mxu0 0.0
    %113 = vmatprep.subr.mxu0 0.0
    %114 = vmatpush2.msra.mxu0 0.0
    %115 = vmatprep.subr.mxu0 0.0
    %116 = vmatpush2.msra.mxu0 0.0
    %117 = vmatprep.subr.mxu0 0.0
    %118 = vmatpush2.msra.mxu0 0.0
    %119 = vmatprep.subr.mxu0 0.0
    %120 = vmatpush2.msra.mxu0 0.0
    %121 = vmatprep.subr.mxu0 0.0
    %122 = vmatpush2.msra.mxu0 0.0
    %123 = vmatprep.subr.mxu0 0.0
    %124 = vmatpush2.msra.mxu0 0.0
    %125 = vmatprep.mubr.f32.mxu0 0.0
    %126 = vmatmul.mubr.f32.gmra.mxu0 %v56
    %v127 = vpop.f32.mrf.mxu0
    %v128 = vadd.f32 %v53, %v127
    %v129 = vpop.f32.mrf.mxu0
    %130 = vmatprep.mubr.f32.mxu0 0.0
    %131 = vmatmul.mubr.f32.gmra.mxu0 %v59
    %v132 = vpop.f32.mrf.mxu0
    %v133 = vadd.f32 %v53, %v132
    %v134 = vpop.f32.mrf.mxu0
    %135 = vdwg.mxu0
    %v136 = vld [vmem:[#allocation5 + $0x8] sm:$0xff]
    %v137 = vld [vmem:[#allocation5 + $0x18] sm:$0xff]
    %v138 = vld [vmem:[#allocation5 + $0x28] sm:$0xff]
    %v139 = vld [vmem:[#allocation5 + $0x38] sm:$0xff]
    %v140 = vld [vmem:[#allocation5 + $0x48] sm:$0xff]
    %v141 = vld [vmem:[#allocation5 + $0x58] sm:$0xff]
    %v142 = vld [vmem:[#allocation5 + $0x68] sm:$0xff]
    %v143 = vld [vmem:[#allocation5 + $0x78] sm:$0xff]
    %v144 = vld [vmem:[#allocation5 + $0xe8] ss:$0 sm:$0xff]
    %v145 = vld [vmem:[#allocation5 + $0xc0] sm:$0xff]
    %v146 = vld [vmem:[#allocation5 + $0xd0] sm:$0x3]
    %v147 = vld [vmem:[#allocation5 + $0x80] sm:$0xff]
    %v148 = vld [vmem:[#allocation5 + $0x90] sm:$0xff]
    %v149 = vld [vmem:[#allocation5 + $0xa0] sm:$0xff]
    %v150 = vld [vmem:[#allocation5 + $0xb0] sm:$0xff]
    %vm151 = vcmask 130048
    %v153 = vsel %vm151, %v147, 0
    %v156 = vsel %vm151, %v128, 0
    %158 = vmatprep.subr.mxu0 0.0
    %159 = vmatpush1.xpose.msra.mxu0 0.0
    %160 = vmatprep.subr.mxu0 0.0
    %161 = vmatpush1.xpose.msra.mxu0 0.0
    %162 = vmatprep.subr.mxu0 0.0
    %163 = vmatpush1.xpose.msra.mxu0 0.0
    %164 = vmatprep.subr.mxu0 0.0
    %165 = vmatpush1.xpose.msra.mxu0 0.0
    %166 = vmatprep.subr.mxu0 0.0
    %167 = vmatpush1.xpose.msra.mxu0 0.0
    %168 = vmatprep.subr.mxu0 0.0
    %169 = vmatpush1.xpose.msra.mxu0 0.0
    %170 = vmatprep.subr.mxu0 0.0
    %171 = vmatpush1.xpose.msra.mxu0 0.0
    %172 = vmatprep.subr.mxu0 0.0
    %173 = vmatpush1.xpose.msra.mxu0 0.0
    %174 = vmatprep.subr.mxu0 0.0
    %175 = vmatpush1.xpose.msra.mxu0 0.0
    %176 = vmatprep.subr.mxu0 0.0
    %177 = vmatpush1.xpose.msra.mxu0 0.0
    %178 = vmatprep.subr.mxu0 0.0
    %179 = vmatpush1.xpose.msra.mxu0 0.0
    %180 = vmatprep.subr.mxu0 0.0
    %181 = vmatpush1.xpose.msra.mxu0 0.0
    %182 = vmatprep.subr.mxu0 0.0
    %183 = vmatpush1.xpose.msra.mxu0 0.0
    %184 = vmatprep.subr.mxu0 0.0
    %185 = vmatpush1.xpose.msra.mxu0 0.0
    %186 = vmatprep.subr.mxu0 0.0
    %187 = vmatpush1.xpose.msra.mxu0 0.0
    %188 = vmatprep.subr.mxu0 0.0
    %189 = vmatpush1.xpose.msra.mxu0 %v156
    %190 = vmatprep.subr.mxu0 0.0
    %191 = vmatpush2.xpose.msra.mxu0 0.0
    %192 = vmatprep.subr.mxu0 0.0
    %193 = vmatpush2.xpose.msra.mxu0 0.0
    %194 = vmatprep.subr.mxu0 0.0
    %195 = vmatpush2.xpose.msra.mxu0 0.0
    %196 = vmatprep.subr.mxu0 0.0
    %197 = vmatpush2.xpose.msra.mxu0 0.0
    %198 = vmatprep.subr.mxu0 0.0
    %199 = vmatpush2.xpose.msra.mxu0 0.0
    %200 = vmatprep.subr.mxu0 0.0
    %201 = vmatpush2.xpose.msra.mxu0 0.0
    %202 = vmatprep.subr.mxu0 0.0
    %203 = vmatpush2.xpose.msra.mxu0 0.0
    %204 = vmatprep.subr.mxu0 0.0
    %205 = vmatpush2.xpose.msra.mxu0 0.0
    %206 = vmatprep.subr.mxu0 0.0
    %207 = vmatpush2.xpose.msra.mxu0 0.0
    %208 = vmatprep.subr.mxu0 0.0
    %209 = vmatpush2.xpose.msra.mxu0 0.0
    %210 = vmatprep.subr.mxu0 0.0
    %211 = vmatpush2.xpose.msra.mxu0 0.0
    %212 = vmatprep.subr.mxu0 0.0
    %213 = vmatpush2.xpose.msra.mxu0 0.0
    %214 = vmatprep.subr.mxu0 0.0
    %215 = vmatpush2.xpose.msra.mxu0 0.0
    %216 = vmatprep.subr.mxu0 0.0
    %217 = vmatpush2.xpose.msra.mxu0 0.0
    %218 = vmatprep.subr.mxu0 0.0
    %219 = vmatpush2.xpose.msra.mxu0 0.0
    %220 = vmatprep.subr.mxu0 0.0
    %221 = vmatpush2.xpose.msra.mxu0 0.0
    %222 = vmatprep.mubr.f32.mxu0 0.0
    %223 = vmatmul.mubr.f32.gmra.mxu0 %v153
    %v224 = vpop.f32.mrf.mxu0
    %v225 = vadd.f32 0.0, %v224
    %v226 = vpop.f32.mrf.mxu0
    %227 = vdwg.mxu0
    %vm228 = vcmask 64512
    %v229 = vsel %vm228, %v225, -inf
    %230 = vmax.xlane.f32.xlu0 %v229
    %v231 = vpop.xlane.xlu0 %230
    %v232 = vsub.f32 %v225, %v231
    %v233 = vmul.f32 %v232, 1.442695
    %v234 = vpow.pop %v233
    %v235 = vsel %vm228, %v234, 0.0
    %236 = vadd.xlane.f32.xlu0 %v235
    %v237 = vpop.xlane.xlu0 %236
    %v238 = vrcp.pop %v237
    %v239 = vmul.f32 %v234, %v238
    %240 = vrot.lane.b32.xlu0 %v128, 64
    %v241 = vpop.permute.xlu0 %240
    %v244 = vsel %vm228, %v239, 0
    %246 = vmatprep.subr.mxu0 0.0
    %247 = vmatpush1.msra.mxu0 0.0
    %248 = vmatprep.subr.mxu0 0.0
    %249 = vmatpush1.msra.mxu0 0.0
    %250 = vmatprep.subr.mxu0 0.0
    %251 = vmatpush1.msra.mxu0 0.0
    %252 = vmatprep.subr.mxu0 0.0
    %253 = vmatpush1.msra.mxu0 0.0
    %254 = vmatprep.subr.mxu0 0.0
    %255 = vmatpush1.msra.mxu0 0.0
    %256 = vmatprep.subr.mxu0 0.0
    %257 = vmatpush1.msra.mxu0 0.0
    %258 = vmatprep.subr.mxu0 0.0
    %259 = vmatpush1.msra.mxu0 0.0
    %260 = vmatprep.subr.mxu0 0.0
    %261 = vmatpush1.msra.mxu0 0.0
    %262 = vmatprep.subr.mxu0 0.0
    %263 = vmatpush1.msra.mxu0 0.0
    %264 = vmatprep.subr.mxu0 0.0
    %265 = vmatpush1.msra.mxu0 0.0
    %266 = vmatprep.subr.mxu0 0.0
    %267 = vmatpush1.msra.mxu0 0.0
    %268 = vmatprep.subr.mxu0 0.0
    %269 = vmatpush1.msra.mxu0 0.0
    %270 = vmatprep.subr.mxu0 0.0
    %271 = vmatpush1.msra.mxu0 0.0
    %272 = vmatprep.subr.mxu0 0.0
    %273 = vmatpush1.msra.mxu0 0.0
    %274 = vmatprep.subr.mxu0 0.0
    %275 = vmatpush1.msra.mxu0 0.0
    %276 = vmatprep.subr.mxu0 0.0
    %277 = vmatpush1.msra.mxu0 %v241
    %278 = vmatprep.subr.mxu0 0.0
    %279 = vmatpush2.msra.mxu0 0.0
    %280 = vmatprep.subr.mxu0 0.0
    %281 = vmatpush2.msra.mxu0 0.0
    %282 = vmatprep.subr.mxu0 0.0
    %283 = vmatpush2.msra.mxu0 0.0
    %284 = vmatprep.subr.mxu0 0.0
    %285 = vmatpush2.msra.mxu0 0.0
    %286 = vmatprep.subr.mxu0 0.0
    %287 = vmatpush2.msra.mxu0 0.0
    %288 = vmatprep.subr.mxu0 0.0
    %289 = vmatpush2.msra.mxu0 0.0
    %290 = vmatprep.subr.mxu0 0.0
    %291 = vmatpush2.msra.mxu0 0.0
    %292 = vmatprep.subr.mxu0 0.0
    %293 = vmatpush2.msra.mxu0 0.0
    %294 = vmatprep.subr.mxu0 0.0
    %295 = vmatpush2.msra.mxu0 0.0
    %296 = vmatprep.subr.mxu0 0.0
    %297 = vmatpush2.msra.mxu0 0.0
    %298 = vmatprep.subr.mxu0 0.0
    %299 = vmatpush2.msra.mxu0 0.0
    %300 = vmatprep.subr.mxu0 0.0
    %301 = vmatpush2.msra.mxu0 0.0
    %302 = vmatprep.subr.mxu0 0.0
    %303 = vmatpush2.msra.mxu0 0.0
    %304 = vmatprep.subr.mxu0 0.0
    %305 = vmatpush2.msra.mxu0 0.0
    %306 = vmatprep.subr.mxu0 0.0
    %307 = vmatpush2.msra.mxu0 0.0
    %308 = vmatprep.subr.mxu0 0.0
    %309 = vmatpush2.msra.mxu0 0.0
    %310 = vmatprep.mubr.f32.mxu0 0.0
    %311 = vmatmul.mubr.f32.gmra.mxu0 %v244
    %v312 = vpop.f32.mrf.mxu0
    %v313 = vadd.f32 0.0, %v312
    %v314 = vpop.f32.mrf.mxu0
    %315 = vdwg.mxu0
    %316 = vrot.lane.b32.xlu0 %v128, 112
    %v317 = vpop.permute.xlu0 %316
    %v319 = vsel %vm151, %v148, 0
    %v321 = vsel %vm151, %v317, 0
    %323 = vmatprep.subr.mxu0 0.0
    %324 = vmatpush1.xpose.msra.mxu0 0.0
    %325 = vmatprep.subr.mxu0 0.0
    %326 = vmatpush1.xpose.msra.mxu0 0.0
    %327 = vmatprep.subr.mxu0 0.0
    %328 = vmatpush1.xpose.msra.mxu0 0.0
    %329 = vmatprep.subr.mxu0 0.0
    %330 = vmatpush1.xpose.msra.mxu0 0.0
    %331 = vmatprep.subr.mxu0 0.0
    %332 = vmatpush1.xpose.msra.mxu0 0.0
    %333 = vmatprep.subr.mxu0 0.0
    %334 = vmatpush1.xpose.msra.mxu0 0.0
    %335 = vmatprep.subr.mxu0 0.0
    %336 = vmatpush1.xpose.msra.mxu0 0.0
    %337 = vmatprep.subr.mxu0 0.0
    %338 = vmatpush1.xpose.msra.mxu0 0.0
    %339 = vmatprep.subr.mxu0 0.0
    %340 = vmatpush1.xpose.msra.mxu0 0.0
    %341 = vmatprep.subr.mxu0 0.0
    %342 = vmatpush1.xpose.msra.mxu0 0.0
    %343 = vmatprep.subr.mxu0 0.0
    %344 = vmatpush1.xpose.msra.mxu0 0.0
    %345 = vmatprep.subr.mxu0 0.0
    %346 = vmatpush1.xpose.msra.mxu0 0.0
    %347 = vmatprep.subr.mxu0 0.0
    %348 = vmatpush1.xpose.msra.mxu0 0.0
    %349 = vmatprep.subr.mxu0 0.0
    %350 = vmatpush1.xpose.msra.mxu0 0.0
    %351 = vmatprep.subr.mxu0 0.0
    %352 = vmatpush1.xpose.msra.mxu0 0.0
    %353 = vmatprep.subr.mxu0 0.0
    %354 = vmatpush1.xpose.msra.mxu0 %v321
    %355 = vmatprep.subr.mxu0 0.0
    %356 = vmatpush2.xpose.msra.mxu0 0.0
    %357 = vmatprep.subr.mxu0 0.0
    %358 = vmatpush2.xpose.msra.mxu0 0.0
    %359 = vmatprep.subr.mxu0 0.0
    %360 = vmatpush2.xpose.msra.mxu0 0.0
    %361 = vmatprep.subr.mxu0 0.0
    %362 = vmatpush2.xpose.msra.mxu0 0.0
    %363 = vmatprep.subr.mxu0 0.0
    %364 = vmatpush2.xpose.msra.mxu0 0.0
    %365 = vmatprep.subr.mxu0 0.0
    %366 = vmatpush2.xpose.msra.mxu0 0.0
    %367 = vmatprep.subr.mxu0 0.0
    %368 = vmatpush2.xpose.msra.mxu0 0.0
    %369 = vmatprep.subr.mxu0 0.0
    %370 = vmatpush2.xpose.msra.mxu0 0.0
    %371 = vmatprep.subr.mxu0 0.0
    %372 = vmatpush2.xpose.msra.mxu0 0.0
    %373 = vmatprep.subr.mxu0 0.0
    %374 = vmatpush2.xpose.msra.mxu0 0.0
    %375 = vmatprep.subr.mxu0 0.0
    %376 = vmatpush2.xpose.msra.mxu0 0.0
    %377 = vmatprep.subr.mxu0 0.0
    %378 = vmatpush2.xpose.msra.mxu0 0.0
    %379 = vmatprep.subr.mxu0 0.0
    %380 = vmatpush2.xpose.msra.mxu0 0.0
    %381 = vmatprep.subr.mxu0 0.0
    %382 = vmatpush2.xpose.msra.mxu0 0.0
    %383 = vmatprep.subr.mxu0 0.0
    %384 = vmatpush2.xpose.msra.mxu0 0.0
    %385 = vmatprep.subr.mxu0 0.0
    %386 = vmatpush2.xpose.msra.mxu0 0.0
    %387 = vmatprep.mubr.f32.mxu0 0.0
    %388 = vmatmul.mubr.f32.gmra.mxu0 %v319
    %v389 = vpop.f32.mrf.mxu0
    %v390 = vadd.f32 0.0, %v389
    %v391 = vpop.f32.mrf.mxu0
    %392 = vdwg.mxu0
    %v393 = vsel %vm228, %v390, -inf
    %394 = vmax.xlane.f32.xlu0 %v393
    %v395 = vpop.xlane.xlu0 %394
    %v396 = vsub.f32 %v390, %v395
    %v397 = vmul.f32 %v396, 1.442695
    %v398 = vpow.pop %v397
    %v399 = vsel %vm228, %v398, 0.0
    %400 = vadd.xlane.f32.xlu0 %v399
    %v401 = vpop.xlane.xlu0 %400
    %v402 = vrcp.pop %v401
    %v403 = vmul.f32 %v398, %v402
    %404 = vrot.lane.b32.xlu0 %v128, 48
    %v405 = vpop.permute.xlu0 %404
    %v408 = vsel %vm228, %v403, 0
    %410 = vmatprep.subr.mxu0 0.0
    %411 = vmatpush1.msra.mxu0 0.0
    %412 = vmatprep.subr.mxu0 0.0
    %413 = vmatpush1.msra.mxu0 0.0
    %414 = vmatprep.subr.mxu0 0.0
    %415 = vmatpush1.msra.mxu0 0.0
    %416 = vmatprep.subr.mxu0 0.0
    %417 = vmatpush1.msra.mxu0 0.0
    %418 = vmatprep.subr.mxu0 0.0
    %419 = vmatpush1.msra.mxu0 0.0
    %420 = vmatprep.subr.mxu0 0.0
    %421 = vmatpush1.msra.mxu0 0.0
    %422 = vmatprep.subr.mxu0 0.0
    %423 = vmatpush1.msra.mxu0 0.0
    %424 = vmatprep.subr.mxu0 0.0
    %425 = vmatpush1.msra.mxu0 0.0
    %426 = vmatprep.subr.mxu0 0.0
    %427 = vmatpush1.msra.mxu0 0.0
    %428 = vmatprep.subr.mxu0 0.0
    %429 = vmatpush1.msra.mxu0 0.0
    %430 = vmatprep.subr.mxu0 0.0
    %431 = vmatpush1.msra.mxu0 0.0
    %432 = vmatprep.subr.mxu0 0.0
    %433 = vmatpush1.msra.mxu0 0.0
    %434 = vmatprep.subr.mxu0 0.0
    %435 = vmatpush1.msra.mxu0 0.0
    %436 = vmatprep.subr.mxu0 0.0
    %437 = vmatpush1.msra.mxu0 0.0
    %438 = vmatprep.subr.mxu0 0.0
    %439 = vmatpush1.msra.mxu0 0.0
    %440 = vmatprep.subr.mxu0 0.0
    %441 = vmatpush1.msra.mxu0 %v405
    %442 = vmatprep.subr.mxu0 0.0
    %443 = vmatpush2.msra.mxu0 0.0
    %444 = vmatprep.subr.mxu0 0.0
    %445 = vmatpush2.msra.mxu0 0.0
    %446 = vmatprep.subr.mxu0 0.0
    %447 = vmatpush2.msra.mxu0 0.0
    %448 = vmatprep.subr.mxu0 0.0
    %449 = vmatpush2.msra.mxu0 0.0
    %450 = vmatprep.subr.mxu0 0.0
    %451 = vmatpush2.msra.mxu0 0.0
    %452 = vmatprep.subr.mxu0 0.0
    %453 = vmatpush2.msra.mxu0 0.0
    %454 = vmatprep.subr.mxu0 0.0
    %455 = vmatpush2.msra.mxu0 0.0
    %456 = vmatprep.subr.mxu0 0.0
    %457 = vmatpush2.msra.mxu0 0.0
    %458 = vmatprep.subr.mxu0 0.0
    %459 = vmatpush2.msra.mxu0 0.0
    %460 = vmatprep.subr.mxu0 0.0
    %461 = vmatpush2.msra.mxu0 0.0
    %462 = vmatprep.subr.mxu0 0.0
    %463 = vmatpush2.msra.mxu0 0.0
    %464 = vmatprep.subr.mxu0 0.0
    %465 = vmatpush2.msra.mxu0 0.0
    %466 = vmatprep.subr.mxu0 0.0
    %467 = vmatpush2.msra.mxu0 0.0
    %468 = vmatprep.subr.mxu0 0.0
    %469 = vmatpush2.msra.mxu0 0.0
    %470 = vmatprep.subr.mxu0 0.0
    %471 = vmatpush2.msra.mxu0 0.0
    %472 = vmatprep.subr.mxu0 0.0
    %473 = vmatpush2.msra.mxu0 0.0
    %474 = vmatprep.mubr.f32.mxu0 0.0
    %475 = vmatmul.mubr.f32.gmra.mxu0 %v408
    %v476 = vpop.f32.mrf.mxu0
    %v477 = vadd.f32 0.0, %v476
    %v478 = vpop.f32.mrf.mxu0
    %479 = vdwg.mxu0
    %480 = vrot.lane.b32.xlu0 %v128, 96
    %v481 = vpop.permute.xlu0 %480
    %v483 = vsel %vm151, %v149, 0
    %v485 = vsel %vm151, %v481, 0
    %487 = vmatprep.subr.mxu0 0.0
    %488 = vmatpush1.xpose.msra.mxu0 0.0
    %489 = vmatprep.subr.mxu0 0.0
    %490 = vmatpush1.xpose.msra.mxu0 0.0
    %491 = vmatprep.subr.mxu0 0.0
    %492 = vmatpush1.xpose.msra.mxu0 0.0
    %493 = vmatprep.subr.mxu0 0.0
    %494 = vmatpush1.xpose.msra.mxu0 0.0
    %495 = vmatprep.subr.mxu0 0.0
    %496 = vmatpush1.xpose.msra.mxu0 0.0
    %497 = vmatprep.subr.mxu0 0.0
    %498 = vmatpush1.xpose.msra.mxu0 0.0
    %499 = vmatprep.subr.mxu0 0.0
    %500 = vmatpush1.xpose.msra.mxu0 0.0
    %501 = vmatprep.subr.mxu0 0.0
    %502 = vmatpush1.xpose.msra.mxu0 0.0
    %503 = vmatprep.subr.mxu0 0.0
    %504 = vmatpush1.xpose.msra.mxu0 0.0
    %505 = vmatprep.subr.mxu0 0.0
    %506 = vmatpush1.xpose.msra.mxu0 0.0
    %507 = vmatprep.subr.mxu0 0.0
    %508 = vmatpush1.xpose.msra.mxu0 0.0
    %509 = vmatprep.subr.mxu0 0.0
    %510 = vmatpush1.xpose.msra.mxu0 0.0
    %511 = vmatprep.subr.mxu0 0.0
    %512 = vmatpush1.xpose.msra.mxu0 0.0
    %513 = vmatprep.subr.mxu0 0.0
    %514 = vmatpush1.xpose.msra.mxu0 0.0
    %515 = vmatprep.subr.mxu0 0.0
    %516 = vmatpush1.xpose.msra.mxu0 0.0
    %517 = vmatprep.subr.mxu0 0.0
    %518 = vmatpush1.xpose.msra.mxu0 %v485
    %519 = vmatprep.subr.mxu0 0.0
    %520 = vmatpush2.xpose.msra.mxu0 0.0
    %521 = vmatprep.subr.mxu0 0.0
    %522 = vmatpush2.xpose.msra.mxu0 0.0
    %523 = vmatprep.subr.mxu0 0.0
    %524 = vmatpush2.xpose.msra.mxu0 0.0
    %525 = vmatprep.subr.mxu0 0.0
    %526 = vmatpush2.xpose.msra.mxu0 0.0
    %527 = vmatprep.subr.mxu0 0.0
    %528 = vmatpush2.xpose.msra.mxu0 0.0
    %529 = vmatprep.subr.mxu0 0.0
    %530 = vmatpush2.xpose.msra.mxu0 0.0
    %531 = vmatprep.subr.mxu0 0.0
    %532 = vmatpush2.xpose.msra.mxu0 0.0
    %533 = vmatprep.subr.mxu0 0.0
    %534 = vmatpush2.xpose.msra.mxu0 0.0
    %535 = vmatprep.subr.mxu0 0.0
    %536 = vmatpush2.xpose.msra.mxu0 0.0
    %537 = vmatprep.subr.mxu0 0.0
    %538 = vmatpush2.xpose.msra.mxu0 0.0
    %539 = vmatprep.subr.mxu0 0.0
    %540 = vmatpush2.xpose.msra.mxu0 0.0
    %541 = vmatprep.subr.mxu0 0.0
    %542 = vmatpush2.xpose.msra.mxu0 0.0
    %543 = vmatprep.subr.mxu0 0.0
    %544 = vmatpush2.xpose.msra.mxu0 0.0
    %545 = vmatprep.subr.mxu0 0.0
    %546 = vmatpush2.xpose.msra.mxu0 0.0
    %547 = vmatprep.subr.mxu0 0.0
    %548 = vmatpush2.xpose.msra.mxu0 0.0
    %549 = vmatprep.subr.mxu0 0.0
    %550 = vmatpush2.xpose.msra.mxu0 0.0
    %551 = vmatprep.mubr.f32.mxu0 0.0
    %552 = vmatmul.mubr.f32.gmra.mxu0 %v483
    %v553 = vpop.f32.mrf.mxu0
    %v554 = vadd.f32 0.0, %v553
    %v555 = vpop.f32.mrf.mxu0
    %556 = vdwg.mxu0
    %v557 = vsel %vm228, %v554, -inf
    %558 = vmax.xlane.f32.xlu0 %v557
    %v559 = vpop.xlane.xlu0 %558
    %v560 = vsub.f32 %v554, %v559
    %v561 = vmul.f32 %v560, 1.442695
    %v562 = vpow.pop %v561
    %v563 = vsel %vm228, %v562, 0.0
    %564 = vadd.xlane.f32.xlu0 %v563
    %v565 = vpop.xlane.xlu0 %564
    %v566 = vrcp.pop %v565
    %v567 = vmul.f32 %v562, %v566
    %568 = vrot.lane.b32.xlu0 %v128, 32
    %v569 = vpop.permute.xlu0 %568
    %v572 = vsel %vm228, %v567, 0
    %574 = vmatprep.subr.mxu0 0.0
    %575 = vmatpush1.msra.mxu0 0.0
    %576 = vmatprep.subr.mxu0 0.0
    %577 = vmatpush1.msra.mxu0 0.0
    %578 = vmatprep.subr.mxu0 0.0
    %579 = vmatpush1.msra.mxu0 0.0
    %580 = vmatprep.subr.mxu0 0.0
    %581 = vmatpush1.msra.mxu0 0.0
    %582 = vmatprep.subr.mxu0 0.0
    %583 = vmatpush1.msra.mxu0 0.0
    %584 = vmatprep.subr.mxu0 0.0
    %585 = vmatpush1.msra.mxu0 0.0
    %586 = vmatprep.subr.mxu0 0.0
    %587 = vmatpush1.msra.mxu0 0.0
    %588 = vmatprep.subr.mxu0 0.0
    %589 = vmatpush1.msra.mxu0 0.0
    %590 = vmatprep.subr.mxu0 0.0
    %591 = vmatpush1.msra.mxu0 0.0
    %592 = vmatprep.subr.mxu0 0.0
    %593 = vmatpush1.msra.mxu0 0.0
    %594 = vmatprep.subr.mxu0 0.0
    %595 = vmatpush1.msra.mxu0 0.0
    %596 = vmatprep.subr.mxu0 0.0
    %597 = vmatpush1.msra.mxu0 0.0
    %598 = vmatprep.subr.mxu0 0.0
    %599 = vmatpush1.msra.mxu0 0.0
    %600 = vmatprep.subr.mxu0 0.0
    %601 = vmatpush1.msra.mxu0 0.0
    %602 = vmatprep.subr.mxu0 0.0
    %603 = vmatpush1.msra.mxu0 0.0
    %604 = vmatprep.subr.mxu0 0.0
    %605 = vmatpush1.msra.mxu0 %v569
    %606 = vmatprep.subr.mxu0 0.0
    %607 = vmatpush2.msra.mxu0 0.0
    %608 = vmatprep.subr.mxu0 0.0
    %609 = vmatpush2.msra.mxu0 0.0
    %610 = vmatprep.subr.mxu0 0.0
    %611 = vmatpush2.msra.mxu0 0.0
    %612 = vmatprep.subr.mxu0 0.0
    %613 = vmatpush2.msra.mxu0 0.0
    %614 = vmatprep.subr.mxu0 0.0
    %615 = vmatpush2.msra.mxu0 0.0
    %616 = vmatprep.subr.mxu0 0.0
    %617 = vmatpush2.msra.mxu0 0.0
    %618 = vmatprep.subr.mxu0 0.0
    %619 = vmatpush2.msra.mxu0 0.0
    %620 = vmatprep.subr.mxu0 0.0
    %621 = vmatpush2.msra.mxu0 0.0
    %622 = vmatprep.subr.mxu0 0.0
    %623 = vmatpush2.msra.mxu0 0.0
    %624 = vmatprep.subr.mxu0 0.0
    %625 = vmatpush2.msra.mxu0 0.0
    %626 = vmatprep.subr.mxu0 0.0
    %627 = vmatpush2.msra.mxu0 0.0
    %628 = vmatprep.subr.mxu0 0.0
    %629 = vmatpush2.msra.mxu0 0.0
    %630 = vmatprep.subr.mxu0 0.0
    %631 = vmatpush2.msra.mxu0 0.0
    %632 = vmatprep.subr.mxu0 0.0
    %633 = vmatpush2.msra.mxu0 0.0
    %634 = vmatprep.subr.mxu0 0.0
    %635 = vmatpush2.msra.mxu0 0.0
    %636 = vmatprep.subr.mxu0 0.0
    %637 = vmatpush2.msra.mxu0 0.0
    %638 = vmatprep.mubr.f32.mxu0 0.0
    %639 = vmatmul.mubr.f32.gmra.mxu0 %v572
    %v640 = vpop.f32.mrf.mxu0
    %v641 = vadd.f32 0.0, %v640
    %v642 = vpop.f32.mrf.mxu0
    %643 = vdwg.mxu0
    %644 = vrot.lane.b32.xlu0 %v128, 80
    %v645 = vpop.permute.xlu0 %644
    %v647 = vsel %vm151, %v150, 0
    %v649 = vsel %vm151, %v645, 0
    %651 = vmatprep.subr.mxu0 0.0
    %652 = vmatpush1.xpose.msra.mxu0 0.0
    %653 = vmatprep.subr.mxu0 0.0
    %654 = vmatpush1.xpose.msra.mxu0 0.0
    %655 = vmatprep.subr.mxu0 0.0
    %656 = vmatpush1.xpose.msra.mxu0 0.0
    %657 = vmatprep.subr.mxu0 0.0
    %658 = vmatpush1.xpose.msra.mxu0 0.0
    %659 = vmatprep.subr.mxu0 0.0
    %660 = vmatpush1.xpose.msra.mxu0 0.0
    %661 = vmatprep.subr.mxu0 0.0
    %662 = vmatpush1.xpose.msra.mxu0 0.0
    %663 = vmatprep.subr.mxu0 0.0
    %664 = vmatpush1.xpose.msra.mxu0 0.0
    %665 = vmatprep.subr.mxu0 0.0
    %666 = vmatpush1.xpose.msra.mxu0 0.0
    %667 = vmatprep.subr.mxu0 0.0
    %668 = vmatpush1.xpose.msra.mxu0 0.0
    %669 = vmatprep.subr.mxu0 0.0
    %670 = vmatpush1.xpose.msra.mxu0 0.0
    %671 = vmatprep.subr.mxu0 0.0
    %672 = vmatpush1.xpose.msra.mxu0 0.0
    %673 = vmatprep.subr.mxu0 0.0
    %674 = vmatpush1.xpose.msra.mxu0 0.0
    %675 = vmatprep.subr.mxu0 0.0
    %676 = vmatpush1.xpose.msra.mxu0 0.0
    %677 = vmatprep.subr.mxu0 0.0
    %678 = vmatpush1.xpose.msra.mxu0 0.0
    %679 = vmatprep.subr.mxu0 0.0
    %680 = vmatpush1.xpose.msra.mxu0 0.0
    %681 = vmatprep.subr.mxu0 0.0
    %682 = vmatpush1.xpose.msra.mxu0 %v649
    %683 = vmatprep.subr.mxu0 0.0
    %684 = vmatpush2.xpose.msra.mxu0 0.0
    %685 = vmatprep.subr.mxu0 0.0
    %686 = vmatpush2.xpose.msra.mxu0 0.0
    %687 = vmatprep.subr.mxu0 0.0
    %688 = vmatpush2.xpose.msra.mxu0 0.0
    %689 = vmatprep.subr.mxu0 0.0
    %690 = vmatpush2.xpose.msra.mxu0 0.0
    %691 = vmatprep.subr.mxu0 0.0
    %692 = vmatpush2.xpose.msra.mxu0 0.0
    %693 = vmatprep.subr.mxu0 0.0
    %694 = vmatpush2.xpose.msra.mxu0 0.0
    %695 = vmatprep.subr.mxu0 0.0
    %696 = vmatpush2.xpose.msra.mxu0 0.0
    %697 = vmatprep.subr.mxu0 0.0
    %698 = vmatpush2.xpose.msra.mxu0 0.0
    %699 = vmatprep.subr.mxu0 0.0
    %700 = vmatpush2.xpose.msra.mxu0 0.0
    %701 = vmatprep.subr.mxu0 0.0
    %702 = vmatpush2.xpose.msra.mxu0 0.0
    %703 = vmatprep.subr.mxu0 0.0
    %704 = vmatpush2.xpose.msra.mxu0 0.0
    %705 = vmatprep.subr.mxu0 0.0
    %706 = vmatpush2.xpose.msra.mxu0 0.0
    %707 = vmatprep.subr.mxu0 0.0
    %708 = vmatpush2.xpose.msra.mxu0 0.0
    %709 = vmatprep.subr.mxu0 0.0
    %710 = vmatpush2.xpose.msra.mxu0 0.0
    %711 = vmatprep.subr.mxu0 0.0
    %712 = vmatpush2.xpose.msra.mxu0 0.0
    %713 = vmatprep.subr.mxu0 0.0
    %714 = vmatpush2.xpose.msra.mxu0 0.0
    %715 = vmatprep.mubr.f32.mxu0 0.0
    %716 = vmatmul.mubr.f32.gmra.mxu0 %v647
    %v717 = vpop.f32.mrf.mxu0
    %v718 = vadd.f32 0.0, %v717
    %v719 = vpop.f32.mrf.mxu0
    %720 = vdwg.mxu0
    %v721 = vsel %vm228, %v718, -inf
    %722 = vmax.xlane.f32.xlu0 %v721
    %v723 = vpop.xlane.xlu0 %722
    %v724 = vsub.f32 %v718, %v723
    %v725 = vmul.f32 %v724, 1.442695
    %v726 = vpow.pop %v725
    %v727 = vsel %vm228, %v726, 0.0
    %728 = vadd.xlane.f32.xlu0 %v727
    %v729 = vpop.xlane.xlu0 %728
    %v730 = vrcp.pop %v729
    %v731 = vmul.f32 %v726, %v730
    %732 = vrot.lane.b32.xlu0 %v128, 16
    %v733 = vpop.permute.xlu0 %732
    %v736 = vsel %vm228, %v731, 0
    %738 = vmatprep.subr.mxu0 0.0
    %739 = vmatpush1.msra.mxu0 0.0
    %740 = vmatprep.subr.mxu0 0.0
    %741 = vmatpush1.msra.mxu0 0.0
    %742 = vmatprep.subr.mxu0 0.0
    %743 = vmatpush1.msra.mxu0 0.0
    %744 = vmatprep.subr.mxu0 0.0
    %745 = vmatpush1.msra.mxu0 0.0
    %746 = vmatprep.subr.mxu0 0.0
    %747 = vmatpush1.msra.mxu0 0.0
    %748 = vmatprep.subr.mxu0 0.0
    %749 = vmatpush1.msra.mxu0 0.0
    %750 = vmatprep.subr.mxu0 0.0
    %751 = vmatpush1.msra.mxu0 0.0
    %752 = vmatprep.subr.mxu0 0.0
    %753 = vmatpush1.msra.mxu0 0.0
    %754 = vmatprep.subr.mxu0 0.0
    %755 = vmatpush1.msra.mxu0 0.0
    %756 = vmatprep.subr.mxu0 0.0
    %757 = vmatpush1.msra.mxu0 0.0
    %758 = vmatprep.subr.mxu0 0.0
    %759 = vmatpush1.msra.mxu0 0.0
    %760 = vmatprep.subr.mxu0 0.0
    %761 = vmatpush1.msra.mxu0 0.0
    %762 = vmatprep.subr.mxu0 0.0
    %763 = vmatpush1.msra.mxu0 0.0
    %764 = vmatprep.subr.mxu0 0.0
    %765 = vmatpush1.msra.mxu0 0.0
    %766 = vmatprep.subr.mxu0 0.0
    %767 = vmatpush1.msra.mxu0 0.0
    %768 = vmatprep.subr.mxu0 0.0
    %769 = vmatpush1.msra.mxu0 %v733
    %770 = vmatprep.subr.mxu0 0.0
    %771 = vmatpush2.msra.mxu0 0.0
    %772 = vmatprep.subr.mxu0 0.0
    %773 = vmatpush2.msra.mxu0 0.0
    %774 = vmatprep.subr.mxu0 0.0
    %775 = vmatpush2.msra.mxu0 0.0
    %776 = vmatprep.subr.mxu0 0.0
    %777 = vmatpush2.msra.mxu0 0.0
    %778 = vmatprep.subr.mxu0 0.0
    %779 = vmatpush2.msra.mxu0 0.0
    %780 = vmatprep.subr.mxu0 0.0
    %781 = vmatpush2.msra.mxu0 0.0
    %782 = vmatprep.subr.mxu0 0.0
    %783 = vmatpush2.msra.mxu0 0.0
    %784 = vmatprep.subr.mxu0 0.0
    %785 = vmatpush2.msra.mxu0 0.0
    %786 = vmatprep.subr.mxu0 0.0
    %787 = vmatpush2.msra.mxu0 0.0
    %788 = vmatprep.subr.mxu0 0.0
    %789 = vmatpush2.msra.mxu0 0.0
    %790 = vmatprep.subr.mxu0 0.0
    %791 = vmatpush2.msra.mxu0 0.0
    %792 = vmatprep.subr.mxu0 0.0
    %793 = vmatpush2.msra.mxu0 0.0
    %794 = vmatprep.subr.mxu0 0.0
    %795 = vmatpush2.msra.mxu0 0.0
    %796 = vmatprep.subr.mxu0 0.0
    %797 = vmatpush2.msra.mxu0 0.0
    %798 = vmatprep.subr.mxu0 0.0
    %799 = vmatpush2.msra.mxu0 0.0
    %800 = vmatprep.subr.mxu0 0.0
    %801 = vmatpush2.msra.mxu0 0.0
    %802 = vmatprep.mubr.f32.mxu0 0.0
    %803 = vmatmul.mubr.f32.gmra.mxu0 %v736
    %v804 = vpop.f32.mrf.mxu0
    %v805 = vadd.f32 0.0, %v804
    %v806 = vpop.f32.mrf.mxu0
    %807 = vdwg.mxu0
    %809 = vrot.lane.b32.xlu0 %v477, 16
    %v810 = vpop.permute.xlu0 %809
    %813 = vrot.lane.b32.xlu0 %v641, 32
    %v814 = vpop.permute.xlu0 %813
    %817 = vrot.lane.b32.xlu0 %v805, 48
    %v818 = vpop.permute.xlu0 %817
    %v820 = vsel %vm151, %v313, %v810
    %vm821 = vcmask 261120
    %v822 = vsel %vm821, %v820, %v814
    %vm823 = vcmask 392192
    %v824 = vsel %vm823, %v822, %v818
    %v826 = vsel %vm54, %v824, 0
    %828 = vmatprep.subr.mxu0 0.0
    %829 = vmatpush1.msra.mxu0 0.0
    %830 = vmatprep.subr.mxu0 0.0
    %831 = vmatpush1.msra.mxu0 0.0
    %832 = vmatprep.subr.mxu0 0.0
    %833 = vmatpush1.msra.mxu0 0.0
    %834 = vmatprep.subr.mxu0 0.0
    %835 = vmatpush1.msra.mxu0 0.0
    %836 = vmatprep.subr.mxu0 0.0
    %837 = vmatpush1.msra.mxu0 0.0
    %838 = vmatprep.subr.mxu0 0.0
    %839 = vmatpush1.msra.mxu0 0.0
    %840 = vmatprep.subr.mxu0 0.0
    %841 = vmatpush1.msra.mxu0 0.0
    %842 = vmatprep.subr.mxu0 0.0
    %843 = vmatpush1.msra.mxu0 0.0
    %844 = vmatprep.subr.mxu0 0.0
    %845 = vmatpush1.msra.mxu0 %v143
    %846 = vmatprep.subr.mxu0 0.0
    %847 = vmatpush1.msra.mxu0 %v142
    %848 = vmatprep.subr.mxu0 0.0
    %849 = vmatpush1.msra.mxu0 %v141
    %850 = vmatprep.subr.mxu0 0.0
    %851 = vmatpush1.msra.mxu0 %v140
    %852 = vmatprep.subr.mxu0 0.0
    %853 = vmatpush1.msra.mxu0 %v139
    %854 = vmatprep.subr.mxu0 0.0
    %855 = vmatpush1.msra.mxu0 %v138
    %856 = vmatprep.subr.mxu0 0.0
    %857 = vmatpush1.msra.mxu0 %v137
    %858 = vmatprep.subr.mxu0 0.0
    %859 = vmatpush1.msra.mxu0 %v136
    %860 = vmatprep.subr.mxu0 0.0
    %861 = vmatpush2.msra.mxu0 0.0
    %862 = vmatprep.subr.mxu0 0.0
    %863 = vmatpush2.msra.mxu0 0.0
    %864 = vmatprep.subr.mxu0 0.0
    %865 = vmatpush2.msra.mxu0 0.0
    %866 = vmatprep.subr.mxu0 0.0
    %867 = vmatpush2.msra.mxu0 0.0
    %868 = vmatprep.subr.mxu0 0.0
    %869 = vmatpush2.msra.mxu0 0.0
    %870 = vmatprep.subr.mxu0 0.0
    %871 = vmatpush2.msra.mxu0 0.0
    %872 = vmatprep.subr.mxu0 0.0
    %873 = vmatpush2.msra.mxu0 0.0
    %874 = vmatprep.subr.mxu0 0.0
    %875 = vmatpush2.msra.mxu0 0.0
    %876 = vmatprep.subr.mxu0 0.0
    %877 = vmatpush2.msra.mxu0 0.0
    %878 = vmatprep.subr.mxu0 0.0
    %879 = vmatpush2.msra.mxu0 0.0
    %880 = vmatprep.subr.mxu0 0.0
    %881 = vmatpush2.msra.mxu0 0.0
    %882 = vmatprep.subr.mxu0 0.0
    %883 = vmatpush2.msra.mxu0 0.0
    %884 = vmatprep.subr.mxu0 0.0
    %885 = vmatpush2.msra.mxu0 0.0
    %886 = vmatprep.subr.mxu0 0.0
    %887 = vmatpush2.msra.mxu0 0.0
    %888 = vmatprep.subr.mxu0 0.0
    %889 = vmatpush2.msra.mxu0 0.0
    %890 = vmatprep.subr.mxu0 0.0
    %891 = vmatpush2.msra.mxu0 0.0
    %892 = vmatprep.mubr.f32.mxu0 0.0
    %893 = vmatmul.mubr.f32.gmra.mxu0 %v826
    %v894 = vpop.f32.mrf.mxu0
    %v895 = vadd.f32 %v144, %v894
    %v896 = vpop.f32.mrf.mxu0
    %897 = vdwg.mxu0
    %906 = vrot.lane.b32.xlu0 %v136, 64
    %v907 = vpop.permute.xlu0 %906
    %908 = vrot.lane.b32.xlu0 %v137, 64
    %v909 = vpop.permute.xlu0 %908
    %910 = vrot.lane.b32.xlu0 %v138, 64
    %v911 = vpop.permute.xlu0 %910
    %912 = vrot.lane.b32.xlu0 %v139, 64
    %v913 = vpop.permute.xlu0 %912
    %914 = vrot.lane.b32.xlu0 %v140, 64
    %v915 = vpop.permute.xlu0 %914
    %916 = vrot.lane.b32.xlu0 %v141, 64
    %v917 = vpop.permute.xlu0 %916
    %918 = vrot.lane.b32.xlu0 %v142, 64
    %v919 = vpop.permute.xlu0 %918
    %920 = vrot.lane.b32.xlu0 %v143, 64
    %v921 = vpop.permute.xlu0 %920
    %v931 = vsel %vm54, %v895, 0
    %933 = vmatprep.subr.mxu0 0.0
    %934 = vmatpush1.msra.mxu0 0.0
    %935 = vmatprep.subr.mxu0 0.0
    %936 = vmatpush1.msra.mxu0 0.0
    %937 = vmatprep.subr.mxu0 0.0
    %938 = vmatpush1.msra.mxu0 0.0
    %939 = vmatprep.subr.mxu0 0.0
    %940 = vmatpush1.msra.mxu0 0.0
    %941 = vmatprep.subr.mxu0 0.0
    %942 = vmatpush1.msra.mxu0 0.0
    %943 = vmatprep.subr.mxu0 0.0
    %944 = vmatpush1.msra.mxu0 0.0
    %945 = vmatprep.subr.mxu0 0.0
    %946 = vmatpush1.msra.mxu0 0.0
    %947 = vmatprep.subr.mxu0 0.0
    %948 = vmatpush1.msra.mxu0 0.0
    %949 = vmatprep.subr.mxu0 0.0
    %950 = vmatpush1.msra.mxu0 %v921
    %951 = vmatprep.subr.mxu0 0.0
    %952 = vmatpush1.msra.mxu0 %v919
    %953 = vmatprep.subr.mxu0 0.0
    %954 = vmatpush1.msra.mxu0 %v917
    %955 = vmatprep.subr.mxu0 0.0
    %956 = vmatpush1.msra.mxu0 %v915
    %957 = vmatprep.subr.mxu0 0.0
    %958 = vmatpush1.msra.mxu0 %v913
    %959 = vmatprep.subr.mxu0 0.0
    %960 = vmatpush1.msra.mxu0 %v911
    %961 = vmatprep.subr.mxu0 0.0
    %962 = vmatpush1.msra.mxu0 %v909
    %963 = vmatprep.subr.mxu0 0.0
    %964 = vmatpush1.msra.mxu0 %v907
    %965 = vmatprep.subr.mxu0 0.0
    %966 = vmatpush2.msra.mxu0 0.0
    %967 = vmatprep.subr.mxu0 0.0
    %968 = vmatpush2.msra.mxu0 0.0
    %969 = vmatprep.subr.mxu0 0.0
    %970 = vmatpush2.msra.mxu0 0.0
    %971 = vmatprep.subr.mxu0 0.0
    %972 = vmatpush2.msra.mxu0 0.0
    %973 = vmatprep.subr.mxu0 0.0
    %974 = vmatpush2.msra.mxu0 0.0
    %975 = vmatprep.subr.mxu0 0.0
    %976 = vmatpush2.msra.mxu0 0.0
    %977 = vmatprep.subr.mxu0 0.0
    %978 = vmatpush2.msra.mxu0 0.0
    %979 = vmatprep.subr.mxu0 0.0
    %980 = vmatpush2.msra.mxu0 0.0
    %981 = vmatprep.subr.mxu0 0.0
    %982 = vmatpush2.msra.mxu0 0.0
    %983 = vmatprep.subr.mxu0 0.0
    %984 = vmatpush2.msra.mxu0 0.0
    %985 = vmatprep.subr.mxu0 0.0
    %986 = vmatpush2.msra.mxu0 0.0
    %987 = vmatprep.subr.mxu0 0.0
    %988 = vmatpush2.msra.mxu0 0.0
    %989 = vmatprep.subr.mxu0 0.0
    %990 = vmatpush2.msra.mxu0 0.0
    %991 = vmatprep.subr.mxu0 0.0
    %992 = vmatpush2.msra.mxu0 0.0
    %993 = vmatprep.subr.mxu0 0.0
    %994 = vmatpush2.msra.mxu0 0.0
    %995 = vmatprep.subr.mxu0 0.0
    %996 = vmatpush2.msra.mxu0 0.0
    %997 = vmatprep.mubr.f32.mxu0 0.0
    %998 = vmatmul.mubr.f32.gmra.mxu0 %v931
    %v999 = vpop.f32.mrf.mxu0
    %v1000 = vadd.f32 0.0, %v999
    %v1001 = vpop.f32.mrf.mxu0
    %1002 = vdwg.mxu0
    %v1003 = vadd.f32 %v145, %v1000
    %v1004 = vmax.f32 %v1003, 0.0
    %1006 = vset.pattern.permute.xlu0 64
    %1007 = vperm.xlu0 %1006, %v146
    %v1008 = vpop.permute.xlu0 %1007
    %v1010 = vsel %vm54, %v146, 0
    %v1013 = vsel %vm54, %v1004, 0
    %1015 = vmatprep.subr.mxu0 0.0
    %1016 = vmatpush1.xpose.msra.mxu0 0.0
    %1017 = vmatprep.subr.mxu0 0.0
    %1018 = vmatpush1.xpose.msra.mxu0 0.0
    %1019 = vmatprep.subr.mxu0 0.0
    %1020 = vmatpush1.xpose.msra.mxu0 0.0
    %1021 = vmatprep.subr.mxu0 0.0
    %1022 = vmatpush1.xpose.msra.mxu0 0.0
    %1023 = vmatprep.subr.mxu0 0.0
    %1024 = vmatpush1.xpose.msra.mxu0 0.0
    %1025 = vmatprep.subr.mxu0 0.0
    %1026 = vmatpush1.xpose.msra.mxu0 0.0
    %1027 = vmatprep.subr.mxu0 0.0
    %1028 = vmatpush1.xpose.msra.mxu0 0.0
    %1029 = vmatprep.subr.mxu0 0.0
    %1030 = vmatpush1.xpose.msra.mxu0 0.0
    %1031 = vmatprep.subr.mxu0 0.0
    %1032 = vmatpush1.xpose.msra.mxu0 0.0
    %1033 = vmatprep.subr.mxu0 0.0
    %1034 = vmatpush1.xpose.msra.mxu0 0.0
    %1035 = vmatprep.subr.mxu0 0.0
    %1036 = vmatpush1.xpose.msra.mxu0 0.0
    %1037 = vmatprep.subr.mxu0 0.0
    %1038 = vmatpush1.xpose.msra.mxu0 0.0
    %1039 = vmatprep.subr.mxu0 0.0
    %1040 = vmatpush1.xpose.msra.mxu0 0.0
    %1041 = vmatprep.subr.mxu0 0.0
    %1042 = vmatpush1.xpose.msra.mxu0 0.0
    %1043 = vmatprep.subr.mxu0 0.0
    %1044 = vmatpush1.xpose.msra.mxu0 0.0
    %1045 = vmatprep.subr.mxu0 0.0
    %1046 = vmatpush1.xpose.msra.mxu0 %v1013
    %1047 = vmatprep.subr.mxu0 0.0
    %1048 = vmatpush2.xpose.msra.mxu0 0.0
    %1049 = vmatprep.subr.mxu0 0.0
    %1050 = vmatpush2.xpose.msra.mxu0 0.0
    %1051 = vmatprep.subr.mxu0 0.0
    %1052 = vmatpush2.xpose.msra.mxu0 0.0
    %1053 = vmatprep.subr.mxu0 0.0
    %1054 = vmatpush2.xpose.msra.mxu0 0.0
    %1055 = vmatprep.subr.mxu0 0.0
    %1056 = vmatpush2.xpose.msra.mxu0 0.0
    %1057 = vmatprep.subr.mxu0 0.0
    %1058 = vmatpush2.xpose.msra.mxu0 0.0
    %1059 = vmatprep.subr.mxu0 0.0
    %1060 = vmatpush2.xpose.msra.mxu0 0.0
    %1061 = vmatprep.subr.mxu0 0.0
    %1062 = vmatpush2.xpose.msra.mxu0 0.0
    %1063 = vmatprep.subr.mxu0 0.0
    %1064 = vmatpush2.xpose.msra.mxu0 0.0
    %1065 = vmatprep.subr.mxu0 0.0
    %1066 = vmatpush2.xpose.msra.mxu0 0.0
    %1067 = vmatprep.subr.mxu0 0.0
    %1068 = vmatpush2.xpose.msra.mxu0 0.0
    %1069 = vmatprep.subr.mxu0 0.0
    %1070 = vmatpush2.xpose.msra.mxu0 0.0
    %1071 = vmatprep.subr.mxu0 0.0
    %1072 = vmatpush2.xpose.msra.mxu0 0.0
    %1073 = vmatprep.subr.mxu0 0.0
    %1074 = vmatpush2.xpose.msra.mxu0 0.0
    %1075 = vmatprep.subr.mxu0 0.0
    %1076 = vmatpush2.xpose.msra.mxu0 0.0
    %1077 = vmatprep.subr.mxu0 0.0
    %1078 = vmatpush2.xpose.msra.mxu0 0.0
    %1079 = vmatprep.mubr.f32.mxu0 0.0
    %1080 = vmatmul.mubr.f32.gmra.mxu0 %v1010
    %v1081 = vpop.f32.mrf.mxu0
    %v1082 = vadd.f32 %v1008, %v1081
    %v1083 = vpop.f32.mrf.mxu0
    %1084 = vdwg.mxu0
    %v1085 = vxor.u32 %v1082, 2147483648
    %v1086 = vmul.f32 %v1085, 1.442695
    %v1087 = vpow.pop %v1086
    %v1088 = vadd.f32 %v1087, 1.0
    %v1089 = vrcp.pop %v1088
    %v1090 = vmul.f32 1.0, %v1089
    %vm1091 = vcmask 57344
    %1092 = vst.msk [vmem:[#allocation7] sm:$0x1] %vm1091, %v1090
    %v1093 = vtanh.pop %v1082
    %v1094 = vmul.f32 %v1093, 100.0
    %vm1095 = vcmask 58369
    %1096 = vst.msk [vmem:[#allocation8 - $0x1] sm:$0x2] %vm1095, %v1094
    %v1098 = vsel %vm151, %v133, 0
    %1100 = vmatprep.subr.mxu0 0.0
    %1101 = vmatpush1.xpose.msra.mxu0 0.0
    %1102 = vmatprep.subr.mxu0 0.0
    %1103 = vmatpush1.xpose.msra.mxu0 0.0
    %1104 = vmatprep.subr.mxu0 0.0
    %1105 = vmatpush1.xpose.msra.mxu0 0.0
    %1106 = vmatprep.subr.mxu0 0.0
    %1107 = vmatpush1.xpose.msra.mxu0 0.0
    %1108 = vmatprep.subr.mxu0 0.0
    %1109 = vmatpush1.xpose.msra.mxu0 0.0
    %1110 = vmatprep.subr.mxu0 0.0
    %1111 = vmatpush1.xpose.msra.mxu0 0.0
    %1112 = vmatprep.subr.mxu0 0.0
    %1113 = vmatpush1.xpose.msra.mxu0 0.0
    %1114 = vmatprep.subr.mxu0 0.0
    %1115 = vmatpush1.xpose.msra.mxu0 0.0
    %1116 = vmatprep.subr.mxu0 0.0
    %1117 = vmatpush1.xpose.msra.mxu0 0.0
    %1118 = vmatprep.subr.mxu0 0.0
    %1119 = vmatpush1.xpose.msra.mxu0 0.0
    %1120 = vmatprep.subr.mxu0 0.0
    %1121 = vmatpush1.xpose.msra.mxu0 0.0
    %1122 = vmatprep.subr.mxu0 0.0
    %1123 = vmatpush1.xpose.msra.mxu0 0.0
    %1124 = vmatprep.subr.mxu0 0.0
    %1125 = vmatpush1.xpose.msra.mxu0 0.0
    %1126 = vmatprep.subr.mxu0 0.0
    %1127 = vmatpush1.xpose.msra.mxu0 0.0
    %1128 = vmatprep.subr.mxu0 0.0
    %1129 = vmatpush1.xpose.msra.mxu0 0.0
    %1130 = vmatprep.subr.mxu0 0.0
    %1131 = vmatpush1.xpose.msra.mxu0 %v1098
    %1132 = vmatprep.subr.mxu0 0.0
    %1133 = vmatpush2.xpose.msra.mxu0 0.0
    %1134 = vmatprep.subr.mxu0 0.0
    %1135 = vmatpush2.xpose.msra.mxu0 0.0
    %1136 = vmatprep.subr.mxu0 0.0
    %1137 = vmatpush2.xpose.msra.mxu0 0.0
    %1138 = vmatprep.subr.mxu0 0.0
    %1139 = vmatpush2.xpose.msra.mxu0 0.0
    %1140 = vmatprep.subr.mxu0 0.0
    %1141 = vmatpush2.xpose.msra.mxu0 0.0
    %1142 = vmatprep.subr.mxu0 0.0
    %1143 = vmatpush2.xpose.msra.mxu0 0.0
    %1144 = vmatprep.subr.mxu0 0.0
    %1145 = vmatpush2.xpose.msra.mxu0 0.0
    %1146 = vmatprep.subr.mxu0 0.0
    %1147 = vmatpush2.xpose.msra.mxu0 0.0
    %1148 = vmatprep.subr.mxu0 0.0
    %1149 = vmatpush2.xpose.msra.mxu0 0.0
    %1150 = vmatprep.subr.mxu0 0.0
    %1151 = vmatpush2.xpose.msra.mxu0 0.0
    %1152 = vmatprep.subr.mxu0 0.0
    %1153 = vmatpush2.xpose.msra.mxu0 0.0
    %1154 = vmatprep.subr.mxu0 0.0
    %1155 = vmatpush2.xpose.msra.mxu0 0.0
    %1156 = vmatprep.subr.mxu0 0.0
    %1157 = vmatpush2.xpose.msra.mxu0 0.0
    %1158 = vmatprep.subr.mxu0 0.0
    %1159 = vmatpush2.xpose.msra.mxu0 0.0
    %1160 = vmatprep.subr.mxu0 0.0
    %1161 = vmatpush2.xpose.msra.mxu0 0.0
    %1162 = vmatprep.subr.mxu0 0.0
    %1163 = vmatpush2.xpose.msra.mxu0 0.0
    %1164 = vmatprep.mubr.f32.mxu0 0.0
    %1165 = vmatmul.mubr.f32.gmra.mxu0 %v153
    %v1166 = vpop.f32.mrf.mxu0
    %v1167 = vadd.f32 0.0, %v1166
    %v1168 = vpop.f32.mrf.mxu0
    %1169 = vdwg.mxu0
    %v1170 = vsel %vm228, %v1167, -inf
    %1171 = vmax.xlane.f32.xlu0 %v1170
    %v1172 = vpop.xlane.xlu0 %1171
    %v1173 = vsub.f32 %v1167, %v1172
    %v1174 = vmul.f32 %v1173, 1.442695
    %v1175 = vpow.pop %v1174
    %v1176 = vsel %vm228, %v1175, 0.0
    %1177 = vadd.xlane.f32.xlu0 %v1176
    %v1178 = vpop.xlane.xlu0 %1177
    %v1179 = vrcp.pop %v1178
    %v1180 = vmul.f32 %v1175, %v1179
    %1181 = vrot.lane.b32.xlu0 %v133, 64
    %v1182 = vpop.permute.xlu0 %1181
    %v1185 = vsel %vm228, %v1180, 0
    %1187 = vmatprep.subr.mxu0 0.0
    %1188 = vmatpush1.msra.mxu0 0.0
    %1189 = vmatprep.subr.mxu0 0.0
    %1190 = vmatpush1.msra.mxu0 0.0
    %1191 = vmatprep.subr.mxu0 0.0
    %1192 = vmatpush1.msra.mxu0 0.0
    %1193 = vmatprep.subr.mxu0 0.0
    %1194 = vmatpush1.msra.mxu0 0.0
    %1195 = vmatprep.subr.mxu0 0.0
    %1196 = vmatpush1.msra.mxu0 0.0
    %1197 = vmatprep.subr.mxu0 0.0
    %1198 = vmatpush1.msra.mxu0 0.0
    %1199 = vmatprep.subr.mxu0 0.0
    %1200 = vmatpush1.msra.mxu0 0.0
    %1201 = vmatprep.subr.mxu0 0.0
    %1202 = vmatpush1.msra.mxu0 0.0
    %1203 = vmatprep.subr.mxu0 0.0
    %1204 = vmatpush1.msra.mxu0 0.0
    %1205 = vmatprep.subr.mxu0 0.0
    %1206 = vmatpush1.msra.mxu0 0.0
    %1207 = vmatprep.subr.mxu0 0.0
    %1208 = vmatpush1.msra.mxu0 0.0
    %1209 = vmatprep.subr.mxu0 0.0
    %1210 = vmatpush1.msra.mxu0 0.0
    %1211 = vmatprep.subr.mxu0 0.0
    %1212 = vmatpush1.msra.mxu0 0.0
    %1213 = vmatprep.subr.mxu0 0.0
    %1214 = vmatpush1.msra.mxu0 0.0
    %1215 = vmatprep.subr.mxu0 0.0
    %1216 = vmatpush1.msra.mxu0 0.0
    %1217 = vmatprep.subr.mxu0 0.0
    %1218 = vmatpush1.msra.mxu0 %v1182
    %1219 = vmatprep.subr.mxu0 0.0
    %1220 = vmatpush2.msra.mxu0 0.0
    %1221 = vmatprep.subr.mxu0 0.0
    %1222 = vmatpush2.msra.mxu0 0.0
    %1223 = vmatprep.subr.mxu0 0.0
    %1224 = vmatpush2.msra.mxu0 0.0
    %1225 = vmatprep.subr.mxu0 0.0
    %1226 = vmatpush2.msra.mxu0 0.0
    %1227 = vmatprep.subr.mxu0 0.0
    %1228 = vmatpush2.msra.mxu0 0.0
    %1229 = vmatprep.subr.mxu0 0.0
    %1230 = vmatpush2.msra.mxu0 0.0
    %1231 = vmatprep.subr.mxu0 0.0
    %1232 = vmatpush2.msra.mxu0 0.0
    %1233 = vmatprep.subr.mxu0 0.0
    %1234 = vmatpush2.msra.mxu0 0.0
    %1235 = vmatprep.subr.mxu0 0.0
    %1236 = vmatpush2.msra.mxu0 0.0
    %1237 = vmatprep.subr.mxu0 0.0
    %1238 = vmatpush2.msra.mxu0 0.0
    %1239 = vmatprep.subr.mxu0 0.0
    %1240 = vmatpush2.msra.mxu0 0.0
    %1241 = vmatprep.subr.mxu0 0.0
    %1242 = vmatpush2.msra.mxu0 0.0
    %1243 = vmatprep.subr.mxu0 0.0
    %1244 = vmatpush2.msra.mxu0 0.0
    %1245 = vmatprep.subr.mxu0 0.0
    %1246 = vmatpush2.msra.mxu0 0.0
    %1247 = vmatprep.subr.mxu0 0.0
    %1248 = vmatpush2.msra.mxu0 0.0
    %1249 = vmatprep.subr.mxu0 0.0
    %1250 = vmatpush2.msra.mxu0 0.0
    %1251 = vmatprep.mubr.f32.mxu0 0.0
    %1252 = vmatmul.mubr.f32.gmra.mxu0 %v1185
    %v1253 = vpop.f32.mrf.mxu0
    %v1254 = vadd.f32 0.0, %v1253
    %v1255 = vpop.f32.mrf.mxu0
    %1256 = vdwg.mxu0
    %1257 = vrot.lane.b32.xlu0 %v133, 112
    %v1258 = vpop.permute.xlu0 %1257
    %v1259 = vsel %vm151, %v1258, 0
    %1261 = vmatprep.subr.mxu0 0.0
    %1262 = vmatpush1.xpose.msra.mxu0 0.0
    %1263 = vmatprep.subr.mxu0 0.0
    %1264 = vmatpush1.xpose.msra.mxu0 0.0
    %1265 = vmatprep.subr.mxu0 0.0
    %1266 = vmatpush1.xpose.msra.mxu0 0.0
    %1267 = vmatprep.subr.mxu0 0.0
    %1268 = vmatpush1.xpose.msra.mxu0 0.0
    %1269 = vmatprep.subr.mxu0 0.0
    %1270 = vmatpush1.xpose.msra.mxu0 0.0
    %1271 = vmatprep.subr.mxu0 0.0
    %1272 = vmatpush1.xpose.msra.mxu0 0.0
    %1273 = vmatprep.subr.mxu0 0.0
    %1274 = vmatpush1.xpose.msra.mxu0 0.0
    %1275 = vmatprep.subr.mxu0 0.0
    %1276 = vmatpush1.xpose.msra.mxu0 0.0
    %1277 = vmatprep.subr.mxu0 0.0
    %1278 = vmatpush1.xpose.msra.mxu0 0.0
    %1279 = vmatprep.subr.mxu0 0.0
    %1280 = vmatpush1.xpose.msra.mxu0 0.0
    %1281 = vmatprep.subr.mxu0 0.0
    %1282 = vmatpush1.xpose.msra.mxu0 0.0
    %1283 = vmatprep.subr.mxu0 0.0
    %1284 = vmatpush1.xpose.msra.mxu0 0.0
    %1285 = vmatprep.subr.mxu0 0.0
    %1286 = vmatpush1.xpose.msra.mxu0 0.0
    %1287 = vmatprep.subr.mxu0 0.0
    %1288 = vmatpush1.xpose.msra.mxu0 0.0
    %1289 = vmatprep.subr.mxu0 0.0
    %1290 = vmatpush1.xpose.msra.mxu0 0.0
    %1291 = vmatprep.subr.mxu0 0.0
    %1292 = vmatpush1.xpose.msra.mxu0 %v1259
    %1293 = vmatprep.subr.mxu0 0.0
    %1294 = vmatpush2.xpose.msra.mxu0 0.0
    %1295 = vmatprep.subr.mxu0 0.0
    %1296 = vmatpush2.xpose.msra.mxu0 0.0
    %1297 = vmatprep.subr.mxu0 0.0
    %1298 = vmatpush2.xpose.msra.mxu0 0.0
    %1299 = vmatprep.subr.mxu0 0.0
    %1300 = vmatpush2.xpose.msra.mxu0 0.0
    %1301 = vmatprep.subr.mxu0 0.0
    %1302 = vmatpush2.xpose.msra.mxu0 0.0
    %1303 = vmatprep.subr.mxu0 0.0
    %1304 = vmatpush2.xpose.msra.mxu0 0.0
    %1305 = vmatprep.subr.mxu0 0.0
    %1306 = vmatpush2.xpose.msra.mxu0 0.0
    %1307 = vmatprep.subr.mxu0 0.0
    %1308 = vmatpush2.xpose.msra.mxu0 0.0
    %1309 = vmatprep.subr.mxu0 0.0
    %1310 = vmatpush2.xpose.msra.mxu0 0.0
    %1311 = vmatprep.subr.mxu0 0.0
    %1312 = vmatpush2.xpose.msra.mxu0 0.0
    %1313 = vmatprep.subr.mxu0 0.0
    %1314 = vmatpush2.xpose.msra.mxu0 0.0
    %1315 = vmatprep.subr.mxu0 0.0
    %1316 = vmatpush2.xpose.msra.mxu0 0.0
    %1317 = vmatprep.subr.mxu0 0.0
    %1318 = vmatpush2.xpose.msra.mxu0 0.0
    %1319 = vmatprep.subr.mxu0 0.0
    %1320 = vmatpush2.xpose.msra.mxu0 0.0
    %1321 = vmatprep.subr.mxu0 0.0
    %1322 = vmatpush2.xpose.msra.mxu0 0.0
    %1323 = vmatprep.subr.mxu0 0.0
    %1324 = vmatpush2.xpose.msra.mxu0 0.0
    %1325 = vmatprep.mubr.f32.mxu0 0.0
    %1326 = vmatmul.mubr.f32.gmra.mxu0 %v319
    %v1327 = vpop.f32.mrf.mxu0
    %v1328 = vadd.f32 0.0, %v1327
    %v1329 = vpop.f32.mrf.mxu0
    %1330 = vdwg.mxu0
    %v1331 = vsel %vm228, %v1328, -inf
    %1332 = vmax.xlane.f32.xlu0 %v1331
    %v1333 = vpop.xlane.xlu0 %1332
    %v1334 = vsub.f32 %v1328, %v1333
    %v1335 = vmul.f32 %v1334, 1.442695
    %v1336 = vpow.pop %v1335
    %v1337 = vsel %vm228, %v1336, 0.0
    %1338 = vadd.xlane.f32.xlu0 %v1337
    %v1339 = vpop.xlane.xlu0 %1338
    %v1340 = vrcp.pop %v1339
    %v1341 = vmul.f32 %v1336, %v1340
    %1342 = vrot.lane.b32.xlu0 %v133, 48
    %v1343 = vpop.permute.xlu0 %1342
    %v1346 = vsel %vm228, %v1341, 0
    %1348 = vmatprep.subr.mxu0 0.0
    %1349 = vmatpush1.msra.mxu0 0.0
    %1350 = vmatprep.subr.mxu0 0.0
    %1351 = vmatpush1.msra.mxu0 0.0
    %1352 = vmatprep.subr.mxu0 0.0
    %1353 = vmatpush1.msra.mxu0 0.0
    %1354 = vmatprep.subr.mxu0 0.0
    %1355 = vmatpush1.msra.mxu0 0.0
    %1356 = vmatprep.subr.mxu0 0.0
    %1357 = vmatpush1.msra.mxu0 0.0
    %1358 = vmatprep.subr.mxu0 0.0
    %1359 = vmatpush1.msra.mxu0 0.0
    %1360 = vmatprep.subr.mxu0 0.0
    %1361 = vmatpush1.msra.mxu0 0.0
    %1362 = vmatprep.subr.mxu0 0.0
    %1363 = vmatpush1.msra.mxu0 0.0
    %1364 = vmatprep.subr.mxu0 0.0
    %1365 = vmatpush1.msra.mxu0 0.0
    %1366 = vmatprep.subr.mxu0 0.0
    %1367 = vmatpush1.msra.mxu0 0.0
    %1368 = vmatprep.subr.mxu0 0.0
    %1369 = vmatpush1.msra.mxu0 0.0
    %1370 = vmatprep.subr.mxu0 0.0
    %1371 = vmatpush1.msra.mxu0 0.0
    %1372 = vmatprep.subr.mxu0 0.0
    %1373 = vmatpush1.msra.mxu0 0.0
    %1374 = vmatprep.subr.mxu0 0.0
    %1375 = vmatpush1.msra.mxu0 0.0
    %1376 = vmatprep.subr.mxu0 0.0
    %1377 = vmatpush1.msra.mxu0 0.0
    %1378 = vmatprep.subr.mxu0 0.0
    %1379 = vmatpush1.msra.mxu0 %v1343
    %1380 = vmatprep.subr.mxu0 0.0
    %1381 = vmatpush2.msra.mxu0 0.0
    %1382 = vmatprep.subr.mxu0 0.0
    %1383 = vmatpush2.msra.mxu0 0.0
    %1384 = vmatprep.subr.mxu0 0.0
    %1385 = vmatpush2.msra.mxu0 0.0
    %1386 = vmatprep.subr.mxu0 0.0
    %1387 = vmatpush2.msra.mxu0 0.0
    %1388 = vmatprep.subr.mxu0 0.0
    %1389 = vmatpush2.msra.mxu0 0.0
    %1390 = vmatprep.subr.mxu0 0.0
    %1391 = vmatpush2.msra.mxu0 0.0
    %1392 = vmatprep.subr.mxu0 0.0
    %1393 = vmatpush2.msra.mxu0 0.0
    %1394 = vmatprep.subr.mxu0 0.0
    %1395 = vmatpush2.msra.mxu0 0.0
    %1396 = vmatprep.subr.mxu0 0.0
    %1397 = vmatpush2.msra.mxu0 0.0
    %1398 = vmatprep.subr.mxu0 0.0
    %1399 = vmatpush2.msra.mxu0 0.0
    %1400 = vmatprep.subr.mxu0 0.0
    %1401 = vmatpush2.msra.mxu0 0.0
    %1402 = vmatprep.subr.mxu0 0.0
    %1403 = vmatpush2.msra.mxu0 0.0
    %1404 = vmatprep.subr.mxu0 0.0
    %1405 = vmatpush2.msra.mxu0 0.0
    %1406 = vmatprep.subr.mxu0 0.0
    %1407 = vmatpush2.msra.mxu0 0.0
    %1408 = vmatprep.subr.mxu0 0.0
    %1409 = vmatpush2.msra.mxu0 0.0
    %1410 = vmatprep.subr.mxu0 0.0
    %1411 = vmatpush2.msra.mxu0 0.0
    %1412 = vmatprep.mubr.f32.mxu0 0.0
    %1413 = vmatmul.mubr.f32.gmra.mxu0 %v1346
    %v1414 = vpop.f32.mrf.mxu0
    %v1415 = vadd.f32 0.0, %v1414
    %v1416 = vpop.f32.mrf.mxu0
    %1417 = vdwg.mxu0
    %1418 = vrot.lane.b32.xlu0 %v133, 96
    %v1419 = vpop.permute.xlu0 %1418
    %v1420 = vsel %vm151, %v1419, 0
    %1422 = vmatprep.subr.mxu0 0.0
    %1423 = vmatpush1.xpose.msra.mxu0 0.0
    %1424 = vmatprep.subr.mxu0 0.0
    %1425 = vmatpush1.xpose.msra.mxu0 0.0
    %1426 = vmatprep.subr.mxu0 0.0
    %1427 = vmatpush1.xpose.msra.mxu0 0.0
    %1428 = vmatprep.subr.mxu0 0.0
    %1429 = vmatpush1.xpose.msra.mxu0 0.0
    %1430 = vmatprep.subr.mxu0 0.0
    %1431 = vmatpush1.xpose.msra.mxu0 0.0
    %1432 = vmatprep.subr.mxu0 0.0
    %1433 = vmatpush1.xpose.msra.mxu0 0.0
    %1434 = vmatprep.subr.mxu0 0.0
    %1435 = vmatpush1.xpose.msra.mxu0 0.0
    %1436 = vmatprep.subr.mxu0 0.0
    %1437 = vmatpush1.xpose.msra.mxu0 0.0
    %1438 = vmatprep.subr.mxu0 0.0
    %1439 = vmatpush1.xpose.msra.mxu0 0.0
    %1440 = vmatprep.subr.mxu0 0.0
    %1441 = vmatpush1.xpose.msra.mxu0 0.0
    %1442 = vmatprep.subr.mxu0 0.0
    %1443 = vmatpush1.xpose.msra.mxu0 0.0
    %1444 = vmatprep.subr.mxu0 0.0
    %1445 = vmatpush1.xpose.msra.mxu0 0.0
    %1446 = vmatprep.subr.mxu0 0.0
    %1447 = vmatpush1.xpose.msra.mxu0 0.0
    %1448 = vmatprep.subr.mxu0 0.0
    %1449 = vmatpush1.xpose.msra.mxu0 0.0
    %1450 = vmatprep.subr.mxu0 0.0
    %1451 = vmatpush1.xpose.msra.mxu0 0.0
    %1452 = vmatprep.subr.mxu0 0.0
    %1453 = vmatpush1.xpose.msra.mxu0 %v1420
    %1454 = vmatprep.subr.mxu0 0.0
    %1455 = vmatpush2.xpose.msra.mxu0 0.0
    %1456 = vmatprep.subr.mxu0 0.0
    %1457 = vmatpush2.xpose.msra.mxu0 0.0
    %1458 = vmatprep.subr.mxu0 0.0
    %1459 = vmatpush2.xpose.msra.mxu0 0.0
    %1460 = vmatprep.subr.mxu0 0.0
    %1461 = vmatpush2.xpose.msra.mxu0 0.0
    %1462 = vmatprep.subr.mxu0 0.0
    %1463 = vmatpush2.xpose.msra.mxu0 0.0
    %1464 = vmatprep.subr.mxu0 0.0
    %1465 = vmatpush2.xpose.msra.mxu0 0.0
    %1466 = vmatprep.subr.mxu0 0.0
    %1467 = vmatpush2.xpose.msra.mxu0 0.0
    %1468 = vmatprep.subr.mxu0 0.0
    %1469 = vmatpush2.xpose.msra.mxu0 0.0
    %1470 = vmatprep.subr.mxu0 0.0
    %1471 = vmatpush2.xpose.msra.mxu0 0.0
    %1472 = vmatprep.subr.mxu0 0.0
    %1473 = vmatpush2.xpose.msra.mxu0 0.0
    %1474 = vmatprep.subr.mxu0 0.0
    %1475 = vmatpush2.xpose.msra.mxu0 0.0
    %1476 = vmatprep.subr.mxu0 0.0
    %1477 = vmatpush2.xpose.msra.mxu0 0.0
    %1478 = vmatprep.subr.mxu0 0.0
    %1479 = vmatpush2.xpose.msra.mxu0 0.0
    %1480 = vmatprep.subr.mxu0 0.0
    %1481 = vmatpush2.xpose.msra.mxu0 0.0
    %1482 = vmatprep.subr.mxu0 0.0
    %1483 = vmatpush2.xpose.msra.mxu0 0.0
    %1484 = vmatprep.subr.mxu0 0.0
    %1485 = vmatpush2.xpose.msra.mxu0 0.0
    %1486 = vmatprep.mubr.f32.mxu0 0.0
    %1487 = vmatmul.mubr.f32.gmra.mxu0 %v483
    %v1488 = vpop.f32.mrf.mxu0
    %v1489 = vadd.f32 0.0, %v1488
    %v1490 = vpop.f32.mrf.mxu0
    %1491 = vdwg.mxu0
    %v1492 = vsel %vm228, %v1489, -inf
    %1493 = vmax.xlane.f32.xlu0 %v1492
    %v1494 = vpop.xlane.xlu0 %1493
    %v1495 = vsub.f32 %v1489, %v1494
    %v1496 = vmul.f32 %v1495, 1.442695
    %v1497 = vpow.pop %v1496
    %v1498 = vsel %vm228, %v1497, 0.0
    %1499 = vadd.xlane.f32.xlu0 %v1498
    %v1500 = vpop.xlane.xlu0 %1499
    %v1501 = vrcp.pop %v1500
    %v1502 = vmul.f32 %v1497, %v1501
    %1503 = vrot.lane.b32.xlu0 %v133, 32
    %v1504 = vpop.permute.xlu0 %1503
    %v1507 = vsel %vm228, %v1502, 0
    %1509 = vmatprep.subr.mxu0 0.0
    %1510 = vmatpush1.msra.mxu0 0.0
    %1511 = vmatprep.subr.mxu0 0.0
    %1512 = vmatpush1.msra.mxu0 0.0
    %1513 = vmatprep.subr.mxu0 0.0
    %1514 = vmatpush1.msra.mxu0 0.0
    %1515 = vmatprep.subr.mxu0 0.0
    %1516 = vmatpush1.msra.mxu0 0.0
    %1517 = vmatprep.subr.mxu0 0.0
    %1518 = vmatpush1.msra.mxu0 0.0
    %1519 = vmatprep.subr.mxu0 0.0
    %1520 = vmatpush1.msra.mxu0 0.0
    %1521 = vmatprep.subr.mxu0 0.0
    %1522 = vmatpush1.msra.mxu0 0.0
    %1523 = vmatprep.subr.mxu0 0.0
    %1524 = vmatpush1.msra.mxu0 0.0
    %1525 = vmatprep.subr.mxu0 0.0
    %1526 = vmatpush1.msra.mxu0 0.0
    %1527 = vmatprep.subr.mxu0 0.0
    %1528 = vmatpush1.msra.mxu0 0.0
    %1529 = vmatprep.subr.mxu0 0.0
    %1530 = vmatpush1.msra.mxu0 0.0
    %1531 = vmatprep.subr.mxu0 0.0
    %1532 = vmatpush1.msra.mxu0 0.0
    %1533 = vmatprep.subr.mxu0 0.0
    %1534 = vmatpush1.msra.mxu0 0.0
    %1535 = vmatprep.subr.mxu0 0.0
    %1536 = vmatpush1.msra.mxu0 0.0
    %1537 = vmatprep.subr.mxu0 0.0
    %1538 = vmatpush1.msra.mxu0 0.0
    %1539 = vmatprep.subr.mxu0 0.0
    %1540 = vmatpush1.msra.mxu0 %v1504
    %1541 = vmatprep.subr.mxu0 0.0
    %1542 = vmatpush2.msra.mxu0 0.0
    %1543 = vmatprep.subr.mxu0 0.0
    %1544 = vmatpush2.msra.mxu0 0.0
    %1545 = vmatprep.subr.mxu0 0.0
    %1546 = vmatpush2.msra.mxu0 0.0
    %1547 = vmatprep.subr.mxu0 0.0
    %1548 = vmatpush2.msra.mxu0 0.0
    %1549 = vmatprep.subr.mxu0 0.0
    %1550 = vmatpush2.msra.mxu0 0.0
    %1551 = vmatprep.subr.mxu0 0.0
    %1552 = vmatpush2.msra.mxu0 0.0
    %1553 = vmatprep.subr.mxu0 0.0
    %1554 = vmatpush2.msra.mxu0 0.0
    %1555 = vmatprep.subr.mxu0 0.0
    %1556 = vmatpush2.msra.mxu0 0.0
    %1557 = vmatprep.subr.mxu0 0.0
    %1558 = vmatpush2.msra.mxu0 0.0
    %1559 = vmatprep.subr.mxu0 0.0
    %1560 = vmatpush2.msra.mxu0 0.0
    %1561 = vmatprep.subr.mxu0 0.0
    %1562 = vmatpush2.msra.mxu0 0.0
    %1563 = vmatprep.subr.mxu0 0.0
    %1564 = vmatpush2.msra.mxu0 0.0
    %1565 = vmatprep.subr.mxu0 0.0
    %1566 = vmatpush2.msra.mxu0 0.0
    %1567 = vmatprep.subr.mxu0 0.0
    %1568 = vmatpush2.msra.mxu0 0.0
    %1569 = vmatprep.subr.mxu0 0.0
    %1570 = vmatpush2.msra.mxu0 0.0
    %1571 = vmatprep.subr.mxu0 0.0
    %1572 = vmatpush2.msra.mxu0 0.0
    %1573 = vmatprep.mubr.f32.mxu0 0.0
    %1574 = vmatmul.mubr.f32.gmra.mxu0 %v1507
    %v1575 = vpop.f32.mrf.mxu0
    %v1576 = vadd.f32 0.0, %v1575
    %v1577 = vpop.f32.mrf.mxu0
    %1578 = vdwg.mxu0
    %1579 = vrot.lane.b32.xlu0 %v133, 80
    %v1580 = vpop.permute.xlu0 %1579
    %v1581 = vsel %vm151, %v1580, 0
    %1583 = vmatprep.subr.mxu0 0.0
    %1584 = vmatpush1.xpose.msra.mxu0 0.0
    %1585 = vmatprep.subr.mxu0 0.0
    %1586 = vmatpush1.xpose.msra.mxu0 0.0
    %1587 = vmatprep.subr.mxu0 0.0
    %1588 = vmatpush1.xpose.msra.mxu0 0.0
    %1589 = vmatprep.subr.mxu0 0.0
    %1590 = vmatpush1.xpose.msra.mxu0 0.0
    %1591 = vmatprep.subr.mxu0 0.0
    %1592 = vmatpush1.xpose.msra.mxu0 0.0
    %1593 = vmatprep.subr.mxu0 0.0
    %1594 = vmatpush1.xpose.msra.mxu0 0.0
    %1595 = vmatprep.subr.mxu0 0.0
    %1596 = vmatpush1.xpose.msra.mxu0 0.0
    %1597 = vmatprep.subr.mxu0 0.0
    %1598 = vmatpush1.xpose.msra.mxu0 0.0
    %1599 = vmatprep.subr.mxu0 0.0
    %1600 = vmatpush1.xpose.msra.mxu0 0.0
    %1601 = vmatprep.subr.mxu0 0.0
    %1602 = vmatpush1.xpose.msra.mxu0 0.0
    %1603 = vmatprep.subr.mxu0 0.0
    %1604 = vmatpush1.xpose.msra.mxu0 0.0
    %1605 = vmatprep.subr.mxu0 0.0
    %1606 = vmatpush1.xpose.msra.mxu0 0.0
    %1607 = vmatprep.subr.mxu0 0.0
    %1608 = vmatpush1.xpose.msra.mxu0 0.0
    %1609 = vmatprep.subr.mxu0 0.0
    %1610 = vmatpush1.xpose.msra.mxu0 0.0
    %1611 = vmatprep.subr.mxu0 0.0
    %1612 = vmatpush1.xpose.msra.mxu0 0.0
    %1613 = vmatprep.subr.mxu0 0.0
    %1614 = vmatpush1.xpose.msra.mxu0 %v1581
    %1615 = vmatprep.subr.mxu0 0.0
    %1616 = vmatpush2.xpose.msra.mxu0 0.0
    %1617 = vmatprep.subr.mxu0 0.0
    %1618 = vmatpush2.xpose.msra.mxu0 0.0
    %1619 = vmatprep.subr.mxu0 0.0
    %1620 = vmatpush2.xpose.msra.mxu0 0.0
    %1621 = vmatprep.subr.mxu0 0.0
    %1622 = vmatpush2.xpose.msra.mxu0 0.0
    %1623 = vmatprep.subr.mxu0 0.0
    %1624 = vmatpush2.xpose.msra.mxu0 0.0
    %1625 = vmatprep.subr.mxu0 0.0
    %1626 = vmatpush2.xpose.msra.mxu0 0.0
    %1627 = vmatprep.subr.mxu0 0.0
    %1628 = vmatpush2.xpose.msra.mxu0 0.0
    %1629 = vmatprep.subr.mxu0 0.0
    %1630 = vmatpush2.xpose.msra.mxu0 0.0
    %1631 = vmatprep.subr.mxu0 0.0
    %1632 = vmatpush2.xpose.msra.mxu0 0.0
    %1633 = vmatprep.subr.mxu0 0.0
    %1634 = vmatpush2.xpose.msra.mxu0 0.0
    %1635 = vmatprep.subr.mxu0 0.0
    %1636 = vmatpush2.xpose.msra.mxu0 0.0
    %1637 = vmatprep.subr.mxu0 0.0
    %1638 = vmatpush2.xpose.msra.mxu0 0.0
    %1639 = vmatprep.subr.mxu0 0.0
    %1640 = vmatpush2.xpose.msra.mxu0 0.0
    %1641 = vmatprep.subr.mxu0 0.0
    %1642 = vmatpush2.xpose.msra.mxu0 0.0
    %1643 = vmatprep.subr.mxu0 0.0
    %1644 = vmatpush2.xpose.msra.mxu0 0.0
    %1645 = vmatprep.subr.mxu0 0.0
    %1646 = vmatpush2.xpose.msra.mxu0 0.0
    %1647 = vmatprep.mubr.f32.mxu0 0.0
    %1648 = vmatmul.mubr.f32.gmra.mxu0 %v647
    %v1649 = vpop.f32.mrf.mxu0
    %v1650 = vadd.f32 0.0, %v1649
    %v1651 = vpop.f32.mrf.mxu0
    %1652 = vdwg.mxu0
    %v1653 = vsel %vm228, %v1650, -inf
    %1654 = vmax.xlane.f32.xlu0 %v1653
    %v1655 = vpop.xlane.xlu0 %1654
    %v1656 = vsub.f32 %v1650, %v1655
    %v1657 = vmul.f32 %v1656, 1.442695
    %v1658 = vpow.pop %v1657
    %v1659 = vsel %vm228, %v1658, 0.0
    %1660 = vadd.xlane.f32.xlu0 %v1659
    %v1661 = vpop.xlane.xlu0 %1660
    %v1662 = vrcp.pop %v1661
    %v1663 = vmul.f32 %v1658, %v1662
    %1664 = vrot.lane.b32.xlu0 %v133, 16
    %v1665 = vpop.permute.xlu0 %1664
    %v1668 = vsel %vm228, %v1663, 0
    %1670 = vmatprep.subr.mxu0 0.0
    %1671 = vmatpush1.msra.mxu0 0.0
    %1672 = vmatprep.subr.mxu0 0.0
    %1673 = vmatpush1.msra.mxu0 0.0
    %1674 = vmatprep.subr.mxu0 0.0
    %1675 = vmatpush1.msra.mxu0 0.0
    %1676 = vmatprep.subr.mxu0 0.0
    %1677 = vmatpush1.msra.mxu0 0.0
    %1678 = vmatprep.subr.mxu0 0.0
    %1679 = vmatpush1.msra.mxu0 0.0
    %1680 = vmatprep.subr.mxu0 0.0
    %1681 = vmatpush1.msra.mxu0 0.0
    %1682 = vmatprep.subr.mxu0 0.0
    %1683 = vmatpush1.msra.mxu0 0.0
    %1684 = vmatprep.subr.mxu0 0.0
    %1685 = vmatpush1.msra.mxu0 0.0
    %1686 = vmatprep.subr.mxu0 0.0
    %1687 = vmatpush1.msra.mxu0 0.0
    %1688 = vmatprep.subr.mxu0 0.0
    %1689 = vmatpush1.msra.mxu0 0.0
    %1690 = vmatprep.subr.mxu0 0.0
    %1691 = vmatpush1.msra.mxu0 0.0
    %1692 = vmatprep.subr.mxu0 0.0
    %1693 = vmatpush1.msra.mxu0 0.0
    %1694 = vmatprep.subr.mxu0 0.0
    %1695 = vmatpush1.msra.mxu0 0.0
    %1696 = vmatprep.subr.mxu0 0.0
    %1697 = vmatpush1.msra.mxu0 0.0
    %1698 = vmatprep.subr.mxu0 0.0
    %1699 = vmatpush1.msra.mxu0 0.0
    %1700 = vmatprep.subr.mxu0 0.0
    %1701 = vmatpush1.msra.mxu0 %v1665
    %1702 = vmatprep.subr.mxu0 0.0
    %1703 = vmatpush2.msra.mxu0 0.0
    %1704 = vmatprep.subr.mxu0 0.0
    %1705 = vmatpush2.msra.mxu0 0.0
    %1706 = vmatprep.subr.mxu0 0.0
    %1707 = vmatpush2.msra.mxu0 0.0
    %1708 = vmatprep.subr.mxu0 0.0
    %1709 = vmatpush2.msra.mxu0 0.0
    %1710 = vmatprep.subr.mxu0 0.0
    %1711 = vmatpush2.msra.mxu0 0.0
    %1712 = vmatprep.subr.mxu0 0.0
    %1713 = vmatpush2.msra.mxu0 0.0
    %1714 = vmatprep.subr.mxu0 0.0
    %1715 = vmatpush2.msra.mxu0 0.0
    %1716 = vmatprep.subr.mxu0 0.0
    %1717 = vmatpush2.msra.mxu0 0.0
    %1718 = vmatprep.subr.mxu0 0.0
    %1719 = vmatpush2.msra.mxu0 0.0
    %1720 = vmatprep.subr.mxu0 0.0
    %1721 = vmatpush2.msra.mxu0 0.0
    %1722 = vmatprep.subr.mxu0 0.0
    %1723 = vmatpush2.msra.mxu0 0.0
    %1724 = vmatprep.subr.mxu0 0.0
    %1725 = vmatpush2.msra.mxu0 0.0
    %1726 = vmatprep.subr.mxu0 0.0
    %1727 = vmatpush2.msra.mxu0 0.0
    %1728 = vmatprep.subr.mxu0 0.0
    %1729 = vmatpush2.msra.mxu0 0.0
    %1730 = vmatprep.subr.mxu0 0.0
    %1731 = vmatpush2.msra.mxu0 0.0
    %1732 = vmatprep.subr.mxu0 0.0
    %1733 = vmatpush2.msra.mxu0 0.0
    %1734 = vmatprep.mubr.f32.mxu0 0.0
    %1735 = vmatmul.mubr.f32.gmra.mxu0 %v1668
    %v1736 = vpop.f32.mrf.mxu0
    %v1737 = vadd.f32 0.0, %v1736
    %v1738 = vpop.f32.mrf.mxu0
    %1739 = vdwg.mxu0
    %1741 = vrot.lane.b32.xlu0 %v1415, 16
    %v1742 = vpop.permute.xlu0 %1741
    %1745 = vrot.lane.b32.xlu0 %v1576, 32
    %v1746 = vpop.permute.xlu0 %1745
    %1749 = vrot.lane.b32.xlu0 %v1737, 48
    %v1750 = vpop.permute.xlu0 %1749
    %v1752 = vsel %vm151, %v1254, %v1742
    %v1753 = vsel %vm821, %v1752, %v1746
    %v1754 = vsel %vm823, %v1753, %v1750
    %v1756 = vsel %vm54, %v1754, 0
    %1758 = vmatprep.subr.mxu0 0.0
    %1759 = vmatpush1.msra.mxu0 0.0
    %1760 = vmatprep.subr.mxu0 0.0
    %1761 = vmatpush1.msra.mxu0 0.0
    %1762 = vmatprep.subr.mxu0 0.0
    %1763 = vmatpush1.msra.mxu0 0.0
    %1764 = vmatprep.subr.mxu0 0.0
    %1765 = vmatpush1.msra.mxu0 0.0
    %1766 = vmatprep.subr.mxu0 0.0
    %1767 = vmatpush1.msra.mxu0 0.0
    %1768 = vmatprep.subr.mxu0 0.0
    %1769 = vmatpush1.msra.mxu0 0.0
    %1770 = vmatprep.subr.mxu0 0.0
    %1771 = vmatpush1.msra.mxu0 0.0
    %1772 = vmatprep.subr.mxu0 0.0
    %1773 = vmatpush1.msra.mxu0 0.0
    %1774 = vmatprep.subr.mxu0 0.0
    %1775 = vmatpush1.msra.mxu0 %v143
    %1776 = vmatprep.subr.mxu0 0.0
    %1777 = vmatpush1.msra.mxu0 %v142
    %1778 = vmatprep.subr.mxu0 0.0
    %1779 = vmatpush1.msra.mxu0 %v141
    %1780 = vmatprep.subr.mxu0 0.0
    %1781 = vmatpush1.msra.mxu0 %v140
    %1782 = vmatprep.subr.mxu0 0.0
    %1783 = vmatpush1.msra.mxu0 %v139
    %1784 = vmatprep.subr.mxu0 0.0
    %1785 = vmatpush1.msra.mxu0 %v138
    %1786 = vmatprep.subr.mxu0 0.0
    %1787 = vmatpush1.msra.mxu0 %v137
    %1788 = vmatprep.subr.mxu0 0.0
    %1789 = vmatpush1.msra.mxu0 %v136
    %1790 = vmatprep.subr.mxu0 0.0
    %1791 = vmatpush2.msra.mxu0 0.0
    %1792 = vmatprep.subr.mxu0 0.0
    %1793 = vmatpush2.msra.mxu0 0.0
    %1794 = vmatprep.subr.mxu0 0.0
    %1795 = vmatpush2.msra.mxu0 0.0
    %1796 = vmatprep.subr.mxu0 0.0
    %1797 = vmatpush2.msra.mxu0 0.0
    %1798 = vmatprep.subr.mxu0 0.0
    %1799 = vmatpush2.msra.mxu0 0.0
    %1800 = vmatprep.subr.mxu0 0.0
    %1801 = vmatpush2.msra.mxu0 0.0
    %1802 = vmatprep.subr.mxu0 0.0
    %1803 = vmatpush2.msra.mxu0 0.0
    %1804 = vmatprep.subr.mxu0 0.0
    %1805 = vmatpush2.msra.mxu0 0.0
    %1806 = vmatprep.subr.mxu0 0.0
    %1807 = vmatpush2.msra.mxu0 0.0
    %1808 = vmatprep.subr.mxu0 0.0
    %1809 = vmatpush2.msra.mxu0 0.0
    %1810 = vmatprep.subr.mxu0 0.0
    %1811 = vmatpush2.msra.mxu0 0.0
    %1812 = vmatprep.subr.mxu0 0.0
    %1813 = vmatpush2.msra.mxu0 0.0
    %1814 = vmatprep.subr.mxu0 0.0
    %1815 = vmatpush2.msra.mxu0 0.0
    %1816 = vmatprep.subr.mxu0 0.0
    %1817 = vmatpush2.msra.mxu0 0.0
    %1818 = vmatprep.subr.mxu0 0.0
    %1819 = vmatpush2.msra.mxu0 0.0
    %1820 = vmatprep.subr.mxu0 0.0
    %1821 = vmatpush2.msra.mxu0 0.0
    %1822 = vmatprep.mubr.f32.mxu0 0.0
    %1823 = vmatmul.mubr.f32.gmra.mxu0 %v1756
    %v1824 = vpop.f32.mrf.mxu0
    %v1825 = vadd.f32 %v144, %v1824
    %v1826 = vpop.f32.mrf.mxu0
    %1827 = vdwg.mxu0
    %v1829 = vsel %vm54, %v1825, 0
    %1831 = vmatprep.subr.mxu0 0.0
    %1832 = vmatpush1.msra.mxu0 0.0
    %1833 = vmatprep.subr.mxu0 0.0
    %1834 = vmatpush1.msra.mxu0 0.0
    %1835 = vmatprep.subr.mxu0 0.0
    %1836 = vmatpush1.msra.mxu0 0.0
    %1837 = vmatprep.subr.mxu0 0.0
    %1838 = vmatpush1.msra.mxu0 0.0
    %1839 = vmatprep.subr.mxu0 0.0
    %1840 = vmatpush1.msra.mxu0 0.0
    %1841 = vmatprep.subr.mxu0 0.0
    %1842 = vmatpush1.msra.mxu0 0.0
    %1843 = vmatprep.subr.mxu0 0.0
    %1844 = vmatpush1.msra.mxu0 0.0
    %1845 = vmatprep.subr.mxu0 0.0
    %1846 = vmatpush1.msra.mxu0 0.0
    %1847 = vmatprep.subr.mxu0 0.0
    %1848 = vmatpush1.msra.mxu0 %v921
    %1849 = vmatprep.subr.mxu0 0.0
    %1850 = vmatpush1.msra.mxu0 %v919
    %1851 = vmatprep.subr.mxu0 0.0
    %1852 = vmatpush1.msra.mxu0 %v917
    %1853 = vmatprep.subr.mxu0 0.0
    %1854 = vmatpush1.msra.mxu0 %v915
    %1855 = vmatprep.subr.mxu0 0.0
    %1856 = vmatpush1.msra.mxu0 %v913
    %1857 = vmatprep.subr.mxu0 0.0
    %1858 = vmatpush1.msra.mxu0 %v911
    %1859 = vmatprep.subr.mxu0 0.0
    %1860 = vmatpush1.msra.mxu0 %v909
    %1861 = vmatprep.subr.mxu0 0.0
    %1862 = vmatpush1.msra.mxu0 %v907
    %1863 = vmatprep.subr.mxu0 0.0
    %1864 = vmatpush2.msra.mxu0 0.0
    %1865 = vmatprep.subr.mxu0 0.0
    %1866 = vmatpush2.msra.mxu0 0.0
    %1867 = vmatprep.subr.mxu0 0.0
    %1868 = vmatpush2.msra.mxu0 0.0
    %1869 = vmatprep.subr.mxu0 0.0
    %1870 = vmatpush2.msra.mxu0 0.0
    %1871 = vmatprep.subr.mxu0 0.0
    %1872 = vmatpush2.msra.mxu0 0.0
    %1873 = vmatprep.subr.mxu0 0.0
    %1874 = vmatpush2.msra.mxu0 0.0
    %1875 = vmatprep.subr.mxu0 0.0
    %1876 = vmatpush2.msra.mxu0 0.0
    %1877 = vmatprep.subr.mxu0 0.0
    %1878 = vmatpush2.msra.mxu0 0.0
    %1879 = vmatprep.subr.mxu0 0.0
    %1880 = vmatpush2.msra.mxu0 0.0
    %1881 = vmatprep.subr.mxu0 0.0
    %1882 = vmatpush2.msra.mxu0 0.0
    %1883 = vmatprep.subr.mxu0 0.0
    %1884 = vmatpush2.msra.mxu0 0.0
    %1885 = vmatprep.subr.mxu0 0.0
    %1886 = vmatpush2.msra.mxu0 0.0
    %1887 = vmatprep.subr.mxu0 0.0
    %1888 = vmatpush2.msra.mxu0 0.0
    %1889 = vmatprep.subr.mxu0 0.0
    %1890 = vmatpush2.msra.mxu0 0.0
    %1891 = vmatprep.subr.mxu0 0.0
    %1892 = vmatpush2.msra.mxu0 0.0
    %1893 = vmatprep.subr.mxu0 0.0
    %1894 = vmatpush2.msra.mxu0 0.0
    %1895 = vmatprep.mubr.f32.mxu0 0.0
    %1896 = vmatmul.mubr.f32.gmra.mxu0 %v1829
    %v1897 = vpop.f32.mrf.mxu0
    %v1898 = vadd.f32 0.0, %v1897
    %v1899 = vpop.f32.mrf.mxu0
    %1900 = vdwg.mxu0
    %v1901 = vadd.f32 %v145, %v1898
    %v1902 = vmax.f32 %v1901, 0.0
    %v1904 = vsel %vm54, %v1902, 0
    %1906 = vmatprep.subr.mxu0 0.0
    %1907 = vmatpush1.xpose.msra.mxu0 0.0
    %1908 = vmatprep.subr.mxu0 0.0
    %1909 = vmatpush1.xpose.msra.mxu0 0.0
    %1910 = vmatprep.subr.mxu0 0.0
    %1911 = vmatpush1.xpose.msra.mxu0 0.0
    %1912 = vmatprep.subr.mxu0 0.0
    %1913 = vmatpush1.xpose.msra.mxu0 0.0
    %1914 = vmatprep.subr.mxu0 0.0
    %1915 = vmatpush1.xpose.msra.mxu0 0.0
    %1916 = vmatprep.subr.mxu0 0.0
    %1917 = vmatpush1.xpose.msra.mxu0 0.0
    %1918 = vmatprep.subr.mxu0 0.0
    %1919 = vmatpush1.xpose.msra.mxu0 0.0
    %1920 = vmatprep.subr.mxu0 0.0
    %1921 = vmatpush1.xpose.msra.mxu0 0.0
    %1922 = vmatprep.subr.mxu0 0.0
    %1923 = vmatpush1.xpose.msra.mxu0 0.0
    %1924 = vmatprep.subr.mxu0 0.0
    %1925 = vmatpush1.xpose.msra.mxu0 0.0
    %1926 = vmatprep.subr.mxu0 0.0
    %1927 = vmatpush1.xpose.msra.mxu0 0.0
    %1928 = vmatprep.subr.mxu0 0.0
    %1929 = vmatpush1.xpose.msra.mxu0 0.0
    %1930 = vmatprep.subr.mxu0 0.0
    %1931 = vmatpush1.xpose.msra.mxu0 0.0
    %1932 = vmatprep.subr.mxu0 0.0
    %1933 = vmatpush1.xpose.msra.mxu0 0.0
    %1934 = vmatprep.subr.mxu0 0.0
    %1935 = vmatpush1.xpose.msra.mxu0 0.0
    %1936 = vmatprep.subr.mxu0 0.0
    %1937 = vmatpush1.xpose.msra.mxu0 %v1904
    %1938 = vmatprep.subr.mxu0 0.0
    %1939 = vmatpush2.xpose.msra.mxu0 0.0
    %1940 = vmatprep.subr.mxu0 0.0
    %1941 = vmatpush2.xpose.msra.mxu0 0.0
    %1942 = vmatprep.subr.mxu0 0.0
    %1943 = vmatpush2.xpose.msra.mxu0 0.0
    %1944 = vmatprep.subr.mxu0 0.0
    %1945 = vmatpush2.xpose.msra.mxu0 0.0
    %1946 = vmatprep.subr.mxu0 0.0
    %1947 = vmatpush2.xpose.msra.mxu0 0.0
    %1948 = vmatprep.subr.mxu0 0.0
    %1949 = vmatpush2.xpose.msra.mxu0 0.0
    %1950 = vmatprep.subr.mxu0 0.0
    %1951 = vmatpush2.xpose.msra.mxu0 0.0
    %1952 = vmatprep.subr.mxu0 0.0
    %1953 = vmatpush2.xpose.msra.mxu0 0.0
    %1954 = vmatprep.subr.mxu0 0.0
    %1955 = vmatpush2.xpose.msra.mxu0 0.0
    %1956 = vmatprep.subr.mxu0 0.0
    %1957 = vmatpush2.xpose.msra.mxu0 0.0
    %1958 = vmatprep.subr.mxu0 0.0
    %1959 = vmatpush2.xpose.msra.mxu0 0.0
    %1960 = vmatprep.subr.mxu0 0.0
    %1961 = vmatpush2.xpose.msra.mxu0 0.0
    %1962 = vmatprep.subr.mxu0 0.0
    %1963 = vmatpush2.xpose.msra.mxu0 0.0
    %1964 = vmatprep.subr.mxu0 0.0
    %1965 = vmatpush2.xpose.msra.mxu0 0.0
    %1966 = vmatprep.subr.mxu0 0.0
    %1967 = vmatpush2.xpose.msra.mxu0 0.0
    %1968 = vmatprep.subr.mxu0 0.0
    %1969 = vmatpush2.xpose.msra.mxu0 0.0
    %1970 = vmatprep.mubr.f32.mxu0 0.0
    %1971 = vmatmul.mubr.f32.gmra.mxu0 %v1010
    %v1972 = vpop.f32.mrf.mxu0
    %v1973 = vadd.f32 %v1008, %v1972
    %v1974 = vpop.f32.mrf.mxu0
    %1975 = vdwg.mxu0
    %v1976 = vxor.u32 %v1973, 2147483648
    %v1977 = vmul.f32 %v1976, 1.442695
    %v1978 = vpow.pop %v1977
    %v1979 = vadd.f32 %v1978, 1.0
    %v1980 = vrcp.pop %v1979
    %v1981 = vmul.f32 1.0, %v1980
    %1982 = vst.msk [vmem:[#allocation7 + $0x1] sm:$0x1] %vm1091, %v1981
    %v1983 = vtanh.pop %v1973
    %v1984 = vmul.f32 %v1983, 100.0
    %1985 = vst.msk [vmem:[#allocation8] sm:$0x2] %vm1095, %v1984
    // Predicated region
    $region18: #{crypto_impact_forward.1} parent=1 // pred_check
      _
    $region19: #{crypto_impact_forward.1} parent=1 // pred_check_branch
      %1987 = sbr.rel (0) target = $region21
    $region20: #{crypto_impact_forward.1} parent=1 // pred_region
      %s1989 = ssub.s32 32, 32
      %1990 = vsyncadd [#allocation4], %s1989
      %s1992 = sshll.u32 [#allocation7], 4
      %s1993 = int_to_ptr.vmem [resolvable:$true] %s1992
      %1995 = dma.vmem_to_hbm [thread:$0]  %s1993, 32, %s2, [#allocation4]
    $region21: #{crypto_impact_forward.1} parent=1 // pred_fallthru
      _
    // Predicated region
    $region22: #{crypto_impact_forward.1} parent=1 // pred_check
      _
    $region23: #{crypto_impact_forward.1} parent=1 // pred_check_branch
      %1997 = sbr.rel (0) target = $region25
    $region24: #{crypto_impact_forward.1} parent=1 // pred_region
      %s1999 = ssub.s32 32, 32
      %2000 = vsyncadd [#allocation9], %s1999
      %s2002 = sshll.u32 [#allocation8], 4
      %s2003 = int_to_ptr.vmem [resolvable:$true] %s2002
      %2005 = dma.vmem_to_hbm [thread:$0]  %s2003, 32, %s3, [#allocation9]
    $region25: #{crypto_impact_forward.1} parent=1 // pred_fallthru
      _
    // Predicated region
    $region26: #{crypto_impact_forward.1} parent=1 // pred_check
      _
    $region27: #{crypto_impact_forward.1} parent=1 // pred_check_branch
      %2007 = sbr.rel (0) target = $region29
    $region28: #{crypto_impact_forward.1} parent=1 // pred_region
      %2008 = dma.done [#allocation4], 32
    $region29: #{crypto_impact_forward.1} parent=1 // pred_fallthru
      _
    // Predicated region
    $region30: #{crypto_impact_forward.1} parent=1 // pred_check
      _
    $region31: #{crypto_impact_forward.1} parent=1 // pred_check_branch
      %2010 = sbr.rel (0) target = $region33
    $region32: #{crypto_impact_forward.1} parent=1 // pred_region
      %2011 = dma.done [#allocation9], 32
    $region33: #{crypto_impact_forward.1} parent=1 // pred_fallthru
      _
    %2012 = vsyncpa [#allocation3], 1
    %2013 = vsyncpa [#allocation6], 1
    %2014 = vsyncpa [#allocation4], 1
    %2015 = vsyncpa [#allocation9], 1

</llo_original>
